<compile_context>
chip_gen: v7x
topology: tpu7x:2x2x1
jax: 0.10.0
libtpu: 0.0.40
codegen_flags: <defaults>
</compile_context>

<pallas_src>
import jax
import jax.numpy as jnp
from jax.experimental import pallas as pl
from jax.experimental.pallas import tpu as pltpu


def dialogue_bow_kernel(tok_ref, imask_ref, nids_ref, pids_ref,
                        wenc_ref, benc_ref, w1_ref, b1_ref,
                        w2n_ref, b2n_ref, w2p_ref, b2p_ref,
                        nll_out_ref, den_out_ref):
    imask = imask_ref[...].astype(jnp.float32)                      # [TN, L]
    msum = jnp.sum(imask, axis=1, keepdims=True)                    # [TN, 1]

    # ---- DialogueEmbedder stand-in: masked mean pooling + tanh(linear) ----
    # TODO(synk): the real DialogueEmbedder is an external config-dependent
    # module (it also uses conversation_mask across utterances); this stand-in
    # keeps the bow-scorer / masked-softmax loss path exact and
    # conversation_mask never enters the kernel (no dead DMA).
    inv_len = pl.reciprocal(jnp.maximum(msum, 1.0), approx=True)    # EUP slot
    w = imask * inv_len                                             # [TN, L] pooling weights
    tok = tok_ref[...].astype(jnp.float32)                          # bf16 DMA -> f32 math
    pooled = jnp.sum(tok * w[:, :, None], axis=1)                   # [TN, E]

    # bf16 MXU inputs, f32 accumulation (weights already bf16 from the wrapper).
    enc = jnp.tanh(
        jnp.dot(pooled.astype(jnp.bfloat16), wenc_ref[...],
                preferred_element_type=jnp.float32) + benc_ref[...])         # [TN, D]

    # Fused layer-1 (next|prev side by side); layer-2 as two dense matmuls
    # (no zero-padded block-diagonal weight).
    h = jnp.maximum(
        jnp.dot(enc.astype(jnp.bfloat16), w1_ref[...],
                preferred_element_type=jnp.float32) + b1_ref[...], 0.0)      # [TN, 2H]
    hh = h.astype(jnp.bfloat16)
    hsz = w2n_ref.shape[0]   # H (slice is lane-aligned once H >= 128 in production)
    s_next = jnp.dot(hh[:, :hsz], w2n_ref[...],
                     preferred_element_type=jnp.float32) + b2n_ref[...]      # [TN, V]
    s_prev = jnp.dot(hh[:, hsz:], w2p_ref[...],
                     preferred_element_type=jnp.float32) + b2p_ref[...]      # [TN, V]

    tn, num_l = imask.shape
    v = s_next.shape[1]
    vio = jax.lax.broadcasted_iota(jnp.int32, (tn, v), 1)       # hoisted, reused
    lsel = jax.lax.broadcasted_iota(jnp.int32, (tn, num_l), 1)  # hoisted, reused

    def masked_nll_sum(scores, ids):
        # sum_{n,l} mask[n,l] * (-log_softmax(scores)[n, ids[n,l]])
        #   = sum_n msum[n]*logz[n] - sum_{n,v} c[n,v]*scores[n,v]
        # with c[n,v] = sum_l [ids[n,l]==v]; ids are pre-masked to -1 where
        # mask==0 (mask is 0/1 in the original module), so no per-l mask math.
        m = jnp.max(scores, axis=1, keepdims=True)
        logz = m + jnp.log(jnp.sum(jnp.exp(scores - m), axis=1, keepdims=True))

        def body(l, c):
            # Column l of ids as [TN, 1] via a cheap [TN, L] select + reduce
            # (avoids dynamic lane slicing); the heavy op is the [TN, V]
            # compare+add in int32.
            ids_col = jnp.sum(jnp.where(lsel == l, ids, 0), axis=1, keepdims=True)
            return c + (vio == ids_col).astype(jnp.int32)

        c = jax.lax.fori_loop(0, num_l, body,
                              jnp.zeros((tn, v), jnp.int32), unroll=True)
        gathered = jnp.sum(c.astype(jnp.float32) * scores, keepdims=True)   # (1,1)
        logz_term = jnp.sum(msum * logz, keepdims=True)                     # (1,1)
        return logz_term - gathered

    nll_sum = (masked_nll_sum(s_next, nids_ref[...])
               + masked_nll_sum(s_prev, pids_ref[...]))                     # (1,1)
    den_sum = jnp.sum(msum, keepdims=True)                                  # (1,1)

    # Per-block partial sums, written lane-dense (unmasked vst); reduced in the
    # wrapper.  No cross-step accumulator -> grid axis can be "parallel".
    nll_out_ref[...] = jnp.broadcast_to(nll_sum.reshape(1, 1, 1), (1, 1, 128))
    den_out_ref[...] = jnp.broadcast_to(den_sum.reshape(1, 1, 1), (1, 1, 128))


def _full_spec(shape):
    nd = len(shape)
    return pl.BlockSpec(shape, lambda i, _nd=nd: (0,) * _nd)


def _default_block_n(n):
    # Prefer >= 2 grid steps (so the token DMA double-buffers) with block_n a
    # multiple of 16 (bf16 sublane tile).  Falls back to the full N.
    for bn in (256, 128, 64, 32, 16):
        if n % bn == 0 and n // bn >= 2:
            return bn
    return n


def dialogue_bow_loss(token_embeddings, input_mask, conversation_mask,
                      next_ids, prev_ids, params, *, block_n=None):
    # conversation_mask belongs to the external DialogueEmbedder; it is not used
    # by this stand-in, so it is NOT passed to pallas_call (no dead DMA / VMEM).
    del conversation_mask
    (wenc, benc, w1n, b1n, w2n, b2n, w1p, b1p, w2p, b2p) = params
    N, L, E = token_embeddings.shape
    D = wenc.shape[1]
    H = w1n.shape[1]
    V = w2n.shape[1]

    if block_n is None:
        block_n = _default_block_n(N)
    assert N % block_n == 0, "N must be a multiple of block_n"
    grid_n = N // block_n

    # bf16 on the big DMA stream (token_embeddings) and all MXU inputs; f32
    # accumulation happens in-kernel.
    tok_bf = token_embeddings.astype(jnp.bfloat16)
    wenc_bf = wenc.astype(jnp.bfloat16)
    w1_bf = jnp.concatenate([w1n, w1p], axis=1).astype(jnp.bfloat16)   # [D, 2H]
    b1_all = jnp.concatenate([b1n, b1p], axis=1)                       # [1, 2H]
    w2n_bf = w2n.astype(jnp.bfloat16)                                  # [H, V]
    w2p_bf = w2p.astype(jnp.bfloat16)                                  # [H, V]

    # Pre-mask ids with a -1 sentinel (never equals any vocab index) so the
    # kernel's count loop needs no mask math.  Requires mask in {0, 1}, which is
    # what the original module uses.
    valid = input_mask > 0
    nids = jnp.where(valid, next_ids, -1).astype(jnp.int32)
    pids = jnp.where(valid, prev_ids, -1).astype(jnp.int32)
    imask_f32 = input_mask.astype(jnp.float32)

    out_sds = jax.ShapeDtypeStruct((grid_n, 1, 128), jnp.float32)
    out_spec = pl.BlockSpec((1, 1, 128), lambda i: (i, 0, 0))

    nll_parts, den_parts = pl.pallas_call(
        dialogue_bow_kernel,
        out_shape=(out_sds, out_sds),
        grid=(grid_n,),
        in_specs=[
            pl.BlockSpec((block_n, L, E), lambda i: (i, 0, 0)),   # tokens (bf16)
            pl.BlockSpec((block_n, L), lambda i: (i, 0)),         # input_mask
            pl.BlockSpec((block_n, L), lambda i: (i, 0)),         # next ids (pre-masked)
            pl.BlockSpec((block_n, L), lambda i: (i, 0)),         # prev ids (pre-masked)
            # Weight blocks never change index; on v7x consider
            # pipeline_mode=pl.Buffered(1) on these to halve their VMEM.
            _full_spec((E, D)),                                   # wenc (bf16)
            _full_spec((1, D)),                                   # benc
            _full_spec((D, 2 * H)),                               # fused W1 (bf16)
            _full_spec((1, 2 * H)),                               # fused b1
            _full_spec((H, V)),                                   # next W2 (bf16)
            _full_spec((1, V)),                                   # next b2
            _full_spec((H, V)),                                   # prev W2 (bf16)
            _full_spec((1, V)),                                   # prev b2
        ],
        out_specs=(out_spec, out_spec),
        compiler_params=pltpu.CompilerParams(
            # No cross-step accumulator anymore -> shard grid across TCs (v7x).
            dimension_semantics=("parallel",),
            # 48 MiB: below v7x's 64 MiB physical VMEM; raise toward 64-100 MiB
            # on v6e (128 MiB physical) for larger block_n at production shapes.
            vmem_limit_bytes=48 * 1024 * 1024),
    )(tok_bf, imask_f32, nids, pids,
      wenc_bf, benc, w1_bf, b1_all, w2n_bf, b2n, w2p_bf, b2p)

    nll_total = jnp.sum(nll_parts[:, 0, 0])
    den_total = jnp.sum(den_parts[:, 0, 0])
    return 0.5 * nll_total / jnp.maximum(den_total, 1.0)


def reference_loss(token_embeddings, input_mask, next_ids, prev_ids, params,
                   matmul_dtype=jnp.float32):
    """Pure-JAX reference of the same module math (separate, unfused scorers).

    matmul_dtype=bfloat16 mirrors the kernel's MXU/DMA precision (tokens and
    weights rounded to bf16) for a tight structural check; float32 reproduces
    the original module's numerics.
    """
    (wenc, benc, w1n, b1n, w2n, b2n, w1p, b1p, w2p, b2p) = params
    md = matmul_dtype
    tok = token_embeddings
    if md == jnp.bfloat16:
        tok = tok.astype(jnp.bfloat16).astype(jnp.float32)   # mirror bf16 token DMA
    imask = input_mask.astype(jnp.float32)
    msum = jnp.sum(imask, axis=1, keepdims=True)
    pooled = (jnp.sum(tok * imask[:, :, None], axis=1)
              / jnp.maximum(msum, 1.0))
    enc = jnp.tanh(jnp.dot(pooled.astype(md), wenc.astype(md),
                           preferred_element_type=jnp.float32) + benc)

    def scores(w1, b1, w2, b2):
        h = jnp.maximum(jnp.dot(enc.astype(md), w1.astype(md),
                                preferred_element_type=jnp.float32) + b1, 0.0)
        return jnp.dot(h.astype(md), w2.astype(md),
                       preferred_element_type=jnp.float32) + b2

    def loss_fn(s, ids):
        nlp = -jax.nn.log_softmax(s, axis=1)
        g = jnp.take_along_axis(nlp, ids, axis=1)
        return jnp.sum(g * imask) / jnp.sum(imask)

    nl = loss_fn(scores(w1n, b1n, w2n, b2n), next_ids)
    pv = loss_fn(scores(w1p, b1p, w2p, b2p), prev_ids)
    return 0.5 * (nl + pv)


if __name__ == "__main__":
    # Small, module-consistent shapes.
    B = 4                 # conversation batch size
    U = 8                 # max_num_utterances_batch
    N = B * U             # total utterances (token_embeddings.shape[0]) = 32
    L = 8                 # max_utterance_length
    E = 32                # token embedding dim
    D = 32                # args.output_input_size
    H = 32                # args.output_hidden_size[0]
    V = 128               # args.output_size (bow vocabulary size)

    key = jax.random.PRNGKey(0)
    keys = jax.random.split(key, 16)

    token_embeddings = jax.random.normal(keys[0], (N, L, E), dtype=jnp.float32)
    lengths = jax.random.randint(keys[1], (N,), 2, L + 1)
    input_mask = (jnp.arange(L)[None, :] < lengths[:, None]).astype(jnp.float32)
    conversation_mask = jnp.ones((B, U), dtype=jnp.float32)
    next_ids = jax.random.randint(keys[2], (N, L), 0, V, dtype=jnp.int32)
    prev_ids = jax.random.randint(keys[3], (N, L), 0, V, dtype=jnp.int32)

    s = 0.05
    params = (
        s * jax.random.normal(keys[4], (E, D), dtype=jnp.float32),   # wenc
        s * jax.random.normal(keys[5], (1, D), dtype=jnp.float32),   # benc
        s * jax.random.normal(keys[6], (D, H), dtype=jnp.float32),   # next W1
        s * jax.random.normal(keys[7], (1, H), dtype=jnp.float32),   # next b1
        s * jax.random.normal(keys[8], (H, V), dtype=jnp.float32),   # next W2
        s * jax.random.normal(keys[9], (1, V), dtype=jnp.float32),   # next b2
        s * jax.random.normal(keys[10], (D, H), dtype=jnp.float32),  # prev W1
        s * jax.random.normal(keys[11], (1, H), dtype=jnp.float32),  # prev b1
        s * jax.random.normal(keys[12], (H, V), dtype=jnp.float32),  # prev W2
        s * jax.random.normal(keys[13], (1, V), dtype=jnp.float32),  # prev b2
    )

    # Default block_n -> 16 here (grid of 2 steps, so the token DMA pipelines).
    loss = dialogue_bow_loss(token_embeddings, input_mask, conversation_mask,
                             next_ids, prev_ids, params)
    loss = jax.block_until_ready(loss)

    # Tight check against a reference with matching (bf16-input) numerics.
    ref_bf16 = jax.block_until_ready(
        reference_loss(token_embeddings, input_mask, next_ids, prev_ids, params,
                       matmul_dtype=jnp.bfloat16))
    # Loose check against the original full-f32 module numerics.
    ref_f32 = jax.block_until_ready(
        reference_loss(token_embeddings, input_mask, next_ids, prev_ids, params,
                       matmul_dtype=jnp.float32))

    assert jnp.isfinite(loss), f"non-finite loss: {loss}"
    assert jnp.allclose(loss, ref_bf16, rtol=3e-3, atol=3e-3), (loss, ref_bf16)
    assert jnp.allclose(loss, ref_f32, rtol=2e-2, atol=2e-2), (loss, ref_f32)
    print("KERNEL_OK")
</pallas_src>

<mosaic_0001>
module attributes {stable_mosaic.version = 11 : i64} {
  func.func @dialogue_bow_kernel(%arg0: i32, %arg1: memref<16x8x32xbf16, #tpu.memory_space<vmem>>, %arg2: memref<16x8xf32, #tpu.memory_space<vmem>>, %arg3: memref<16x8xi32, #tpu.memory_space<vmem>>, %arg4: memref<16x8xi32, #tpu.memory_space<vmem>>, %arg5: memref<32x32xbf16, #tpu.memory_space<vmem>>, %arg6: memref<1x32xf32, #tpu.memory_space<vmem>>, %arg7: memref<32x64xbf16, #tpu.memory_space<vmem>>, %arg8: memref<1x64xf32, #tpu.memory_space<vmem>>, %arg9: memref<32x128xbf16, #tpu.memory_space<vmem>>, %arg10: memref<1x128xf32, #tpu.memory_space<vmem>>, %arg11: memref<32x128xbf16, #tpu.memory_space<vmem>>, %arg12: memref<1x128xf32, #tpu.memory_space<vmem>>, %arg13: memref<1x1x128xf32, #tpu.memory_space<vmem>>, %arg14: memref<1x1x128xf32, #tpu.memory_space<vmem>>) attributes {dimension_semantics = [#tpu.dimension_semantics<parallel>], iteration_bounds = array<i64: 2>, scalar_prefetch = 0 : i64, scratch_operands = 0 : i64, tpu.core_type = #tpu.core_type<tc>, window_params = [{transform_indices = @transform_0, window_bounds = array<i64: 16, 8, 32>}, {transform_indices = @transform_1, window_bounds = array<i64: 16, 8>}, {transform_indices = @transform_2, window_bounds = array<i64: 16, 8>}, {transform_indices = @transform_3, window_bounds = array<i64: 16, 8>}, {pipeline_mode = #tpu.pipeline_mode<synchronous>, transform_indices = @transform_4, window_bounds = array<i64: 32, 32>}, {pipeline_mode = #tpu.pipeline_mode<synchronous>, transform_indices = @transform_5, window_bounds = array<i64: 1, 32>}, {pipeline_mode = #tpu.pipeline_mode<synchronous>, transform_indices = @transform_6, window_bounds = array<i64: 32, 64>}, {pipeline_mode = #tpu.pipeline_mode<synchronous>, transform_indices = @transform_7, window_bounds = array<i64: 1, 64>}, {pipeline_mode = #tpu.pipeline_mode<synchronous>, transform_indices = @transform_8, window_bounds = array<i64: 32, 128>}, {pipeline_mode = #tpu.pipeline_mode<synchronous>, transform_indices = @transform_9, window_bounds = array<i64: 1, 128>}, {pipeline_mode = #tpu.pipeline_mode<synchronous>, transform_indices = @transform_10, window_bounds = array<i64: 32, 128>}, {pipeline_mode = #tpu.pipeline_mode<synchronous>, transform_indices = @transform_11, window_bounds = array<i64: 1, 128>}, {transform_indices = @transform_12, window_bounds = array<i64: 1, 1, 128>}, {transform_indices = @transform_13, window_bounds = array<i64: 1, 1, 128>}]} {
    %c0 = arith.constant 0 : index
    %c0_0 = arith.constant 0 : index
    %0 = vector.load %arg2[%c0, %c0_0] : memref<16x8xf32, #tpu.memory_space<vmem>>, vector<16x8xf32>
    %cst = arith.constant dense<0.000000e+00> : vector<16xf32>
    %1 = vector.multi_reduction <add>, %0, %cst [1] : vector<16x8xf32> to vector<16xf32>
    %2 = vector.shape_cast %1 : vector<16xf32> to vector<16x1xf32>
    %cst_1 = arith.constant 1.000000e+00 : f32
    %3 = vector.broadcast %cst_1 : f32 to vector<16x1xf32>
    %4 = arith.maximumf %2, %3 : vector<16x1xf32>
    %5 = tpu.reciprocal %4 {approx = true} : vector<16x1xf32> -> vector<16x1xf32>
    %6 = vector.broadcast %5 : vector<16x1xf32> to vector<16x8xf32>
    %7 = arith.mulf %0, %6 : vector<16x8xf32>
    %c0_2 = arith.constant 0 : index
    %c0_3 = arith.constant 0 : index
    %c0_4 = arith.constant 0 : index
    %8 = vector.load %arg1[%c0_2, %c0_3, %c0_4] : memref<16x8x32xbf16, #tpu.memory_space<vmem>>, vector<16x8x32xbf16>
    %9 = arith.extf %8 : vector<16x8x32xbf16> to vector<16x8x32xf32>
    %10 = vector.shape_cast %7 : vector<16x8xf32> to vector<16x8x1xf32>
    %11 = vector.broadcast %10 : vector<16x8x1xf32> to vector<16x8x32xf32>
    %12 = arith.mulf %9, %11 : vector<16x8x32xf32>
    %cst_5 = arith.constant dense<0.000000e+00> : vector<16x32xf32>
    %13 = vector.multi_reduction <add>, %12, %cst_5 [1] : vector<16x8x32xf32> to vector<16x32xf32>
    %14 = arith.truncf %13 : vector<16x32xf32> to vector<16x32xbf16>
    %c0_6 = arith.constant 0 : index
    %c0_7 = arith.constant 0 : index
    %15 = vector.load %arg5[%c0_6, %c0_7] : memref<32x32xbf16, #tpu.memory_space<vmem>>, vector<32x32xbf16>
    %cst_8 = arith.constant dense<0.000000e+00> : vector<16x32xf32>
    %16 = tpu.matmul %14, %15, %cst_8 {dimension_numbers = #tpu.dot_dimension_numbers<[1], [0], [0], [1], [0, 0, 1, 1], [], []>} : vector<16x32xbf16>, vector<32x32xbf16>, vector<16x32xf32> -> vector<16x32xf32>
    %c0_9 = arith.constant 0 : index
    %c0_10 = arith.constant 0 : index
    %17 = vector.load %arg6[%c0_9, %c0_10] : memref<1x32xf32, #tpu.memory_space<vmem>>, vector<1x32xf32>
    %18 = vector.broadcast %17 : vector<1x32xf32> to vector<16x32xf32>
    %19 = arith.addf %16, %18 : vector<16x32xf32>
    %20 = math.tanh %19 : vector<16x32xf32>
    %21 = arith.truncf %20 : vector<16x32xf32> to vector<16x32xbf16>
    %c0_11 = arith.constant 0 : index
    %c0_12 = arith.constant 0 : index
    %22 = vector.load %arg7[%c0_11, %c0_12] : memref<32x64xbf16, #tpu.memory_space<vmem>>, vector<32x64xbf16>
    %cst_13 = arith.constant dense<0.000000e+00> : vector<16x64xf32>
    %23 = tpu.matmul %21, %22, %cst_13 {dimension_numbers = #tpu.dot_dimension_numbers<[1], [0], [0], [1], [0, 0, 1, 1], [], []>} : vector<16x32xbf16>, vector<32x64xbf16>, vector<16x64xf32> -> vector<16x64xf32>
    %c0_14 = arith.constant 0 : index
    %c0_15 = arith.constant 0 : index
    %24 = vector.load %arg8[%c0_14, %c0_15] : memref<1x64xf32, #tpu.memory_space<vmem>>, vector<1x64xf32>
    %25 = vector.broadcast %24 : vector<1x64xf32> to vector<16x64xf32>
    %26 = arith.addf %23, %25 : vector<16x64xf32>
    %cst_16 = arith.constant 0.000000e+00 : f32
    %27 = vector.broadcast %cst_16 : f32 to vector<16x64xf32>
    %28 = arith.maximumf %26, %27 : vector<16x64xf32>
    %29 = arith.truncf %28 : vector<16x64xf32> to vector<16x64xbf16>
    %30 = vector.extract_strided_slice %29 {offsets = [0, 0], sizes = [16, 32], strides = [1, 1]} : vector<16x64xbf16> to vector<16x32xbf16>
    %c0_17 = arith.constant 0 : index
    %c0_18 = arith.constant 0 : index
    %31 = vector.load %arg9[%c0_17, %c0_18] : memref<32x128xbf16, #tpu.memory_space<vmem>>, vector<32x128xbf16>
    %cst_19 = arith.constant dense<0.000000e+00> : vector<16x128xf32>
    %32 = tpu.matmul %30, %31, %cst_19 {dimension_numbers = #tpu.dot_dimension_numbers<[1], [0], [0], [1], [0, 0, 1, 1], [], []>} : vector<16x32xbf16>, vector<32x128xbf16>, vector<16x128xf32> -> vector<16x128xf32>
    %c0_20 = arith.constant 0 : index
    %c0_21 = arith.constant 0 : index
    %33 = vector.load %arg10[%c0_20, %c0_21] : memref<1x128xf32, #tpu.memory_space<vmem>>, vector<1x128xf32>
    %34 = vector.broadcast %33 : vector<1x128xf32> to vector<16x128xf32>
    %35 = arith.addf %32, %34 : vector<16x128xf32>
    %36 = vector.extract_strided_slice %29 {offsets = [0, 32], sizes = [16, 32], strides = [1, 1]} : vector<16x64xbf16> to vector<16x32xbf16>
    %c0_22 = arith.constant 0 : index
    %c0_23 = arith.constant 0 : index
    %37 = vector.load %arg11[%c0_22, %c0_23] : memref<32x128xbf16, #tpu.memory_space<vmem>>, vector<32x128xbf16>
    %cst_24 = arith.constant dense<0.000000e+00> : vector<16x128xf32>
    %38 = tpu.matmul %36, %37, %cst_24 {dimension_numbers = #tpu.dot_dimension_numbers<[1], [0], [0], [1], [0, 0, 1, 1], [], []>} : vector<16x32xbf16>, vector<32x128xbf16>, vector<16x128xf32> -> vector<16x128xf32>
    %c0_25 = arith.constant 0 : index
    %c0_26 = arith.constant 0 : index
    %39 = vector.load %arg12[%c0_25, %c0_26] : memref<1x128xf32, #tpu.memory_space<vmem>>, vector<1x128xf32>
    %40 = vector.broadcast %39 : vector<1x128xf32> to vector<16x128xf32>
    %41 = arith.addf %38, %40 : vector<16x128xf32>
    %42 = tpu.iota {dimensions = array<i32: 1>} : vector<16x128xi32>
    %43 = tpu.iota {dimensions = array<i32: 1>} : vector<16x8xi32>
    %c0_27 = arith.constant 0 : index
    %c0_28 = arith.constant 0 : index
    %44 = vector.load %arg3[%c0_27, %c0_28] : memref<16x8xi32, #tpu.memory_space<vmem>>, vector<16x8xi32>
    %cst_29 = arith.constant dense<0xFF800000> : vector<16xf32>
    %45 = vector.multi_reduction <maximumf>, %35, %cst_29 [1] : vector<16x128xf32> to vector<16xf32>
    %46 = vector.shape_cast %45 : vector<16xf32> to vector<16x1xf32>
    %47 = vector.broadcast %46 : vector<16x1xf32> to vector<16x128xf32>
    %48 = arith.subf %35, %47 : vector<16x128xf32>
    %49 = math.exp %48 : vector<16x128xf32>
    %cst_30 = arith.constant dense<0.000000e+00> : vector<16xf32>
    %50 = vector.multi_reduction <add>, %49, %cst_30 [1] : vector<16x128xf32> to vector<16xf32>
    %51 = vector.shape_cast %50 : vector<16xf32> to vector<16x1xf32>
    %52 = math.log %51 : vector<16x1xf32>
    %53 = arith.addf %46, %52 : vector<16x1xf32>
    %c0_i32 = arith.constant 0 : i32
    %54 = vector.broadcast %c0_i32 : i32 to vector<16x128xi32>
    %c0_i32_31 = arith.constant 0 : i32
    %55 = vector.broadcast %c0_i32_31 : i32 to vector<16x8xi32>
    %56 = arith.cmpi eq, %43, %55 : vector<16x8xi32>
    %c0_i32_32 = arith.constant 0 : i32
    %57 = vector.broadcast %c0_i32_32 : i32 to vector<16x8xi32>
    %58 = arith.select %56, %44, %57 : vector<16x8xi1>, vector<16x8xi32>
    %cst_33 = arith.constant dense<0> : vector<16xi32>
    %59 = vector.multi_reduction <add>, %58, %cst_33 [1] : vector<16x8xi32> to vector<16xi32>
    %60 = vector.shape_cast %59 : vector<16xi32> to vector<16x1xi32>
    %61 = vector.broadcast %60 : vector<16x1xi32> to vector<16x128xi32>
    %62 = arith.cmpi eq, %42, %61 : vector<16x128xi32>
    %63 = arith.extui %62 : vector<16x128xi1> to vector<16x128xi32>
    %64 = arith.addi %54, %63 : vector<16x128xi32>
    %c1_i32 = arith.constant 1 : i32
    %65 = vector.broadcast %c1_i32 : i32 to vector<16x8xi32>
    %66 = arith.cmpi eq, %43, %65 : vector<16x8xi32>
    %c0_i32_34 = arith.constant 0 : i32
    %67 = vector.broadcast %c0_i32_34 : i32 to vector<16x8xi32>
    %68 = arith.select %66, %44, %67 : vector<16x8xi1>, vector<16x8xi32>
    %cst_35 = arith.constant dense<0> : vector<16xi32>
    %69 = vector.multi_reduction <add>, %68, %cst_35 [1] : vector<16x8xi32> to vector<16xi32>
    %70 = vector.shape_cast %69 : vector<16xi32> to vector<16x1xi32>
    %71 = vector.broadcast %70 : vector<16x1xi32> to vector<16x128xi32>
    %72 = arith.cmpi eq, %42, %71 : vector<16x128xi32>
    %73 = arith.extui %72 : vector<16x128xi1> to vector<16x128xi32>
    %74 = arith.addi %64, %73 : vector<16x128xi32>
    %c2_i32 = arith.constant 2 : i32
    %75 = vector.broadcast %c2_i32 : i32 to vector<16x8xi32>
    %76 = arith.cmpi eq, %43, %75 : vector<16x8xi32>
    %c0_i32_36 = arith.constant 0 : i32
    %77 = vector.broadcast %c0_i32_36 : i32 to vector<16x8xi32>
    %78 = arith.select %76, %44, %77 : vector<16x8xi1>, vector<16x8xi32>
    %cst_37 = arith.constant dense<0> : vector<16xi32>
    %79 = vector.multi_reduction <add>, %78, %cst_37 [1] : vector<16x8xi32> to vector<16xi32>
    %80 = vector.shape_cast %79 : vector<16xi32> to vector<16x1xi32>
    %81 = vector.broadcast %80 : vector<16x1xi32> to vector<16x128xi32>
    %82 = arith.cmpi eq, %42, %81 : vector<16x128xi32>
    %83 = arith.extui %82 : vector<16x128xi1> to vector<16x128xi32>
    %84 = arith.addi %74, %83 : vector<16x128xi32>
    %c3_i32 = arith.constant 3 : i32
    %85 = vector.broadcast %c3_i32 : i32 to vector<16x8xi32>
    %86 = arith.cmpi eq, %43, %85 : vector<16x8xi32>
    %c0_i32_38 = arith.constant 0 : i32
    %87 = vector.broadcast %c0_i32_38 : i32 to vector<16x8xi32>
    %88 = arith.select %86, %44, %87 : vector<16x8xi1>, vector<16x8xi32>
    %cst_39 = arith.constant dense<0> : vector<16xi32>
    %89 = vector.multi_reduction <add>, %88, %cst_39 [1] : vector<16x8xi32> to vector<16xi32>
    %90 = vector.shape_cast %89 : vector<16xi32> to vector<16x1xi32>
    %91 = vector.broadcast %90 : vector<16x1xi32> to vector<16x128xi32>
    %92 = arith.cmpi eq, %42, %91 : vector<16x128xi32>
    %93 = arith.extui %92 : vector<16x128xi1> to vector<16x128xi32>
    %94 = arith.addi %84, %93 : vector<16x128xi32>
    %c4_i32 = arith.constant 4 : i32
    %95 = vector.broadcast %c4_i32 : i32 to vector<16x8xi32>
    %96 = arith.cmpi eq, %43, %95 : vector<16x8xi32>
    %c0_i32_40 = arith.constant 0 : i32
    %97 = vector.broadcast %c0_i32_40 : i32 to vector<16x8xi32>
    %98 = arith.select %96, %44, %97 : vector<16x8xi1>, vector<16x8xi32>
    %cst_41 = arith.constant dense<0> : vector<16xi32>
    %99 = vector.multi_reduction <add>, %98, %cst_41 [1] : vector<16x8xi32> to vector<16xi32>
    %100 = vector.shape_cast %99 : vector<16xi32> to vector<16x1xi32>
    %101 = vector.broadcast %100 : vector<16x1xi32> to vector<16x128xi32>
    %102 = arith.cmpi eq, %42, %101 : vector<16x128xi32>
    %103 = arith.extui %102 : vector<16x128xi1> to vector<16x128xi32>
    %104 = arith.addi %94, %103 : vector<16x128xi32>
    %c5_i32 = arith.constant 5 : i32
    %105 = vector.broadcast %c5_i32 : i32 to vector<16x8xi32>
    %106 = arith.cmpi eq, %43, %105 : vector<16x8xi32>
    %c0_i32_42 = arith.constant 0 : i32
    %107 = vector.broadcast %c0_i32_42 : i32 to vector<16x8xi32>
    %108 = arith.select %106, %44, %107 : vector<16x8xi1>, vector<16x8xi32>
    %cst_43 = arith.constant dense<0> : vector<16xi32>
    %109 = vector.multi_reduction <add>, %108, %cst_43 [1] : vector<16x8xi32> to vector<16xi32>
    %110 = vector.shape_cast %109 : vector<16xi32> to vector<16x1xi32>
    %111 = vector.broadcast %110 : vector<16x1xi32> to vector<16x128xi32>
    %112 = arith.cmpi eq, %42, %111 : vector<16x128xi32>
    %113 = arith.extui %112 : vector<16x128xi1> to vector<16x128xi32>
    %114 = arith.addi %104, %113 : vector<16x128xi32>
    %c6_i32 = arith.constant 6 : i32
    %115 = vector.broadcast %c6_i32 : i32 to vector<16x8xi32>
    %116 = arith.cmpi eq, %43, %115 : vector<16x8xi32>
    %c0_i32_44 = arith.constant 0 : i32
    %117 = vector.broadcast %c0_i32_44 : i32 to vector<16x8xi32>
    %118 = arith.select %116, %44, %117 : vector<16x8xi1>, vector<16x8xi32>
    %cst_45 = arith.constant dense<0> : vector<16xi32>
    %119 = vector.multi_reduction <add>, %118, %cst_45 [1] : vector<16x8xi32> to vector<16xi32>
    %120 = vector.shape_cast %119 : vector<16xi32> to vector<16x1xi32>
    %121 = vector.broadcast %120 : vector<16x1xi32> to vector<16x128xi32>
    %122 = arith.cmpi eq, %42, %121 : vector<16x128xi32>
    %123 = arith.extui %122 : vector<16x128xi1> to vector<16x128xi32>
    %124 = arith.addi %114, %123 : vector<16x128xi32>
    %c7_i32 = arith.constant 7 : i32
    %125 = vector.broadcast %c7_i32 : i32 to vector<16x8xi32>
    %126 = arith.cmpi eq, %43, %125 : vector<16x8xi32>
    %c0_i32_46 = arith.constant 0 : i32
    %127 = vector.broadcast %c0_i32_46 : i32 to vector<16x8xi32>
    %128 = arith.select %126, %44, %127 : vector<16x8xi1>, vector<16x8xi32>
    %cst_47 = arith.constant dense<0> : vector<16xi32>
    %129 = vector.multi_reduction <add>, %128, %cst_47 [1] : vector<16x8xi32> to vector<16xi32>
    %130 = vector.shape_cast %129 : vector<16xi32> to vector<16x1xi32>
    %131 = vector.broadcast %130 : vector<16x1xi32> to vector<16x128xi32>
    %132 = arith.cmpi eq, %42, %131 : vector<16x128xi32>
    %133 = arith.extui %132 : vector<16x128xi1> to vector<16x128xi32>
    %134 = arith.addi %124, %133 : vector<16x128xi32>
    %c8_i32 = arith.constant 8 : i32
    %135 = arith.sitofp %134 : vector<16x128xi32> to vector<16x128xf32>
    %136 = arith.mulf %135, %35 : vector<16x128xf32>
    %137 = vector.shape_cast %136 : vector<16x128xf32> to vector<1x16x128xf32>
    %cst_48 = arith.constant dense<0.000000e+00> : vector<1xf32>
    %138 = vector.multi_reduction <add>, %137, %cst_48 [1, 2] : vector<1x16x128xf32> to vector<1xf32>
    %139 = vector.shape_cast %138 : vector<1xf32> to vector<1x1x1xf32>
    %140 = vector.extract %139[0, 0, 0] : f32 from vector<1x1x1xf32>
    %141 = vector.broadcast %140 : f32 to vector<1x1xf32>
    %142 = arith.mulf %2, %53 : vector<16x1xf32>
    %143 = vector.shape_cast %142 : vector<16x1xf32> to vector<1x16x1xf32>
    %cst_49 = arith.constant dense<0.000000e+00> : vector<1xf32>
    %144 = vector.multi_reduction <add>, %143, %cst_49 [1, 2] : vector<1x16x1xf32> to vector<1xf32>
    %145 = vector.shape_cast %144 : vector<1xf32> to vector<1x1x1xf32>
    %146 = vector.extract %145[0, 0, 0] : f32 from vector<1x1x1xf32>
    %147 = vector.broadcast %146 : f32 to vector<1x1xf32>
    %148 = arith.subf %147, %141 : vector<1x1xf32>
    %c0_50 = arith.constant 0 : index
    %c0_51 = arith.constant 0 : index
    %149 = vector.load %arg4[%c0_50, %c0_51] : memref<16x8xi32, #tpu.memory_space<vmem>>, vector<16x8xi32>
    %cst_52 = arith.constant dense<0xFF800000> : vector<16xf32>
    %150 = vector.multi_reduction <maximumf>, %41, %cst_52 [1] : vector<16x128xf32> to vector<16xf32>
    %151 = vector.shape_cast %150 : vector<16xf32> to vector<16x1xf32>
    %152 = vector.broadcast %151 : vector<16x1xf32> to vector<16x128xf32>
    %153 = arith.subf %41, %152 : vector<16x128xf32>
    %154 = math.exp %153 : vector<16x128xf32>
    %cst_53 = arith.constant dense<0.000000e+00> : vector<16xf32>
    %155 = vector.multi_reduction <add>, %154, %cst_53 [1] : vector<16x128xf32> to vector<16xf32>
    %156 = vector.shape_cast %155 : vector<16xf32> to vector<16x1xf32>
    %157 = math.log %156 : vector<16x1xf32>
    %158 = arith.addf %151, %157 : vector<16x1xf32>
    %c0_i32_54 = arith.constant 0 : i32
    %159 = vector.broadcast %c0_i32_54 : i32 to vector<16x128xi32>
    %c0_i32_55 = arith.constant 0 : i32
    %160 = vector.broadcast %c0_i32_55 : i32 to vector<16x8xi32>
    %161 = arith.cmpi eq, %43, %160 : vector<16x8xi32>
    %c0_i32_56 = arith.constant 0 : i32
    %162 = vector.broadcast %c0_i32_56 : i32 to vector<16x8xi32>
    %163 = arith.select %161, %149, %162 : vector<16x8xi1>, vector<16x8xi32>
    %cst_57 = arith.constant dense<0> : vector<16xi32>
    %164 = vector.multi_reduction <add>, %163, %cst_57 [1] : vector<16x8xi32> to vector<16xi32>
    %165 = vector.shape_cast %164 : vector<16xi32> to vector<16x1xi32>
    %166 = vector.broadcast %165 : vector<16x1xi32> to vector<16x128xi32>
    %167 = arith.cmpi eq, %42, %166 : vector<16x128xi32>
    %168 = arith.extui %167 : vector<16x128xi1> to vector<16x128xi32>
    %169 = arith.addi %159, %168 : vector<16x128xi32>
    %c1_i32_58 = arith.constant 1 : i32
    %170 = vector.broadcast %c1_i32_58 : i32 to vector<16x8xi32>
    %171 = arith.cmpi eq, %43, %170 : vector<16x8xi32>
    %c0_i32_59 = arith.constant 0 : i32
    %172 = vector.broadcast %c0_i32_59 : i32 to vector<16x8xi32>
    %173 = arith.select %171, %149, %172 : vector<16x8xi1>, vector<16x8xi32>
    %cst_60 = arith.constant dense<0> : vector<16xi32>
    %174 = vector.multi_reduction <add>, %173, %cst_60 [1] : vector<16x8xi32> to vector<16xi32>
    %175 = vector.shape_cast %174 : vector<16xi32> to vector<16x1xi32>
    %176 = vector.broadcast %175 : vector<16x1xi32> to vector<16x128xi32>
    %177 = arith.cmpi eq, %42, %176 : vector<16x128xi32>
    %178 = arith.extui %177 : vector<16x128xi1> to vector<16x128xi32>
    %179 = arith.addi %169, %178 : vector<16x128xi32>
    %c2_i32_61 = arith.constant 2 : i32
    %180 = vector.broadcast %c2_i32_61 : i32 to vector<16x8xi32>
    %181 = arith.cmpi eq, %43, %180 : vector<16x8xi32>
    %c0_i32_62 = arith.constant 0 : i32
    %182 = vector.broadcast %c0_i32_62 : i32 to vector<16x8xi32>
    %183 = arith.select %181, %149, %182 : vector<16x8xi1>, vector<16x8xi32>
    %cst_63 = arith.constant dense<0> : vector<16xi32>
    %184 = vector.multi_reduction <add>, %183, %cst_63 [1] : vector<16x8xi32> to vector<16xi32>
    %185 = vector.shape_cast %184 : vector<16xi32> to vector<16x1xi32>
    %186 = vector.broadcast %185 : vector<16x1xi32> to vector<16x128xi32>
    %187 = arith.cmpi eq, %42, %186 : vector<16x128xi32>
    %188 = arith.extui %187 : vector<16x128xi1> to vector<16x128xi32>
    %189 = arith.addi %179, %188 : vector<16x128xi32>
    %c3_i32_64 = arith.constant 3 : i32
    %190 = vector.broadcast %c3_i32_64 : i32 to vector<16x8xi32>
    %191 = arith.cmpi eq, %43, %190 : vector<16x8xi32>
    %c0_i32_65 = arith.constant 0 : i32
    %192 = vector.broadcast %c0_i32_65 : i32 to vector<16x8xi32>
    %193 = arith.select %191, %149, %192 : vector<16x8xi1>, vector<16x8xi32>
    %cst_66 = arith.constant dense<0> : vector<16xi32>
    %194 = vector.multi_reduction <add>, %193, %cst_66 [1] : vector<16x8xi32> to vector<16xi32>
    %195 = vector.shape_cast %194 : vector<16xi32> to vector<16x1xi32>
    %196 = vector.broadcast %195 : vector<16x1xi32> to vector<16x128xi32>
    %197 = arith.cmpi eq, %42, %196 : vector<16x128xi32>
    %198 = arith.extui %197 : vector<16x128xi1> to vector<16x128xi32>
    %199 = arith.addi %189, %198 : vector<16x128xi32>
    %c4_i32_67 = arith.constant 4 : i32
    %200 = vector.broadcast %c4_i32_67 : i32 to vector<16x8xi32>
    %201 = arith.cmpi eq, %43, %200 : vector<16x8xi32>
    %c0_i32_68 = arith.constant 0 : i32
    %202 = vector.broadcast %c0_i32_68 : i32 to vector<16x8xi32>
    %203 = arith.select %201, %149, %202 : vector<16x8xi1>, vector<16x8xi32>
    %cst_69 = arith.constant dense<0> : vector<16xi32>
    %204 = vector.multi_reduction <add>, %203, %cst_69 [1] : vector<16x8xi32> to vector<16xi32>
    %205 = vector.shape_cast %204 : vector<16xi32> to vector<16x1xi32>
    %206 = vector.broadcast %205 : vector<16x1xi32> to vector<16x128xi32>
    %207 = arith.cmpi eq, %42, %206 : vector<16x128xi32>
    %208 = arith.extui %207 : vector<16x128xi1> to vector<16x128xi32>
    %209 = arith.addi %199, %208 : vector<16x128xi32>
    %c5_i32_70 = arith.constant 5 : i32
    %210 = vector.broadcast %c5_i32_70 : i32 to vector<16x8xi32>
    %211 = arith.cmpi eq, %43, %210 : vector<16x8xi32>
    %c0_i32_71 = arith.constant 0 : i32
    %212 = vector.broadcast %c0_i32_71 : i32 to vector<16x8xi32>
    %213 = arith.select %211, %149, %212 : vector<16x8xi1>, vector<16x8xi32>
    %cst_72 = arith.constant dense<0> : vector<16xi32>
    %214 = vector.multi_reduction <add>, %213, %cst_72 [1] : vector<16x8xi32> to vector<16xi32>
    %215 = vector.shape_cast %214 : vector<16xi32> to vector<16x1xi32>
    %216 = vector.broadcast %215 : vector<16x1xi32> to vector<16x128xi32>
    %217 = arith.cmpi eq, %42, %216 : vector<16x128xi32>
    %218 = arith.extui %217 : vector<16x128xi1> to vector<16x128xi32>
    %219 = arith.addi %209, %218 : vector<16x128xi32>
    %c6_i32_73 = arith.constant 6 : i32
    %220 = vector.broadcast %c6_i32_73 : i32 to vector<16x8xi32>
    %221 = arith.cmpi eq, %43, %220 : vector<16x8xi32>
    %c0_i32_74 = arith.constant 0 : i32
    %222 = vector.broadcast %c0_i32_74 : i32 to vector<16x8xi32>
    %223 = arith.select %221, %149, %222 : vector<16x8xi1>, vector<16x8xi32>
    %cst_75 = arith.constant dense<0> : vector<16xi32>
    %224 = vector.multi_reduction <add>, %223, %cst_75 [1] : vector<16x8xi32> to vector<16xi32>
    %225 = vector.shape_cast %224 : vector<16xi32> to vector<16x1xi32>
    %226 = vector.broadcast %225 : vector<16x1xi32> to vector<16x128xi32>
    %227 = arith.cmpi eq, %42, %226 : vector<16x128xi32>
    %228 = arith.extui %227 : vector<16x128xi1> to vector<16x128xi32>
    %229 = arith.addi %219, %228 : vector<16x128xi32>
    %c7_i32_76 = arith.constant 7 : i32
    %230 = vector.broadcast %c7_i32_76 : i32 to vector<16x8xi32>
    %231 = arith.cmpi eq, %43, %230 : vector<16x8xi32>
    %c0_i32_77 = arith.constant 0 : i32
    %232 = vector.broadcast %c0_i32_77 : i32 to vector<16x8xi32>
    %233 = arith.select %231, %149, %232 : vector<16x8xi1>, vector<16x8xi32>
    %cst_78 = arith.constant dense<0> : vector<16xi32>
    %234 = vector.multi_reduction <add>, %233, %cst_78 [1] : vector<16x8xi32> to vector<16xi32>
    %235 = vector.shape_cast %234 : vector<16xi32> to vector<16x1xi32>
    %236 = vector.broadcast %235 : vector<16x1xi32> to vector<16x128xi32>
    %237 = arith.cmpi eq, %42, %236 : vector<16x128xi32>
    %238 = arith.extui %237 : vector<16x128xi1> to vector<16x128xi32>
    %239 = arith.addi %229, %238 : vector<16x128xi32>
    %c8_i32_79 = arith.constant 8 : i32
    %240 = arith.sitofp %239 : vector<16x128xi32> to vector<16x128xf32>
    %241 = arith.mulf %240, %41 : vector<16x128xf32>
    %242 = vector.shape_cast %241 : vector<16x128xf32> to vector<1x16x128xf32>
    %cst_80 = arith.constant dense<0.000000e+00> : vector<1xf32>
    %243 = vector.multi_reduction <add>, %242, %cst_80 [1, 2] : vector<1x16x128xf32> to vector<1xf32>
    %244 = vector.shape_cast %243 : vector<1xf32> to vector<1x1x1xf32>
    %245 = vector.extract %244[0, 0, 0] : f32 from vector<1x1x1xf32>
    %246 = vector.broadcast %245 : f32 to vector<1x1xf32>
    %247 = arith.mulf %2, %158 : vector<16x1xf32>
    %248 = vector.shape_cast %247 : vector<16x1xf32> to vector<1x16x1xf32>
    %cst_81 = arith.constant dense<0.000000e+00> : vector<1xf32>
    %249 = vector.multi_reduction <add>, %248, %cst_81 [1, 2] : vector<1x16x1xf32> to vector<1xf32>
    %250 = vector.shape_cast %249 : vector<1xf32> to vector<1x1x1xf32>
    %251 = vector.extract %250[0, 0, 0] : f32 from vector<1x1x1xf32>
    %252 = vector.broadcast %251 : f32 to vector<1x1xf32>
    %253 = arith.subf %252, %246 : vector<1x1xf32>
    %254 = arith.addf %148, %253 : vector<1x1xf32>
    %255 = vector.shape_cast %2 : vector<16x1xf32> to vector<1x16x1xf32>
    %cst_82 = arith.constant dense<0.000000e+00> : vector<1xf32>
    %256 = vector.multi_reduction <add>, %255, %cst_82 [1, 2] : vector<1x16x1xf32> to vector<1xf32>
    %257 = vector.shape_cast %256 : vector<1xf32> to vector<1x1x1xf32>
    %258 = vector.extract %257[0, 0, 0] : f32 from vector<1x1x1xf32>
    %259 = vector.broadcast %258 : f32 to vector<1x1xf32>
    %260 = vector.shape_cast %254 : vector<1x1xf32> to vector<1x1x1xf32>
    %261 = vector.shape_cast %260 : vector<1x1x1xf32> to vector<1x1x1xf32>
    %262 = vector.broadcast %261 : vector<1x1x1xf32> to vector<1x1x128xf32>
    %c0_83 = arith.constant 0 : index
    %c0_84 = arith.constant 0 : index
    %c0_85 = arith.constant 0 : index
    %263 = vector.load %arg13[%c0_83, %c0_84, %c0_85] : memref<1x1x128xf32, #tpu.memory_space<vmem>>, vector<1x1x128xf32>
    tpu.vector_store %arg13[%c0_83, %c0_84, %c0_85], %262 {strides = array<i32>} : memref<1x1x128xf32, #tpu.memory_space<vmem>>, vector<1x1x128xf32>,
    %264 = vector.shape_cast %259 : vector<1x1xf32> to vector<1x1x1xf32>
    %265 = vector.shape_cast %264 : vector<1x1x1xf32> to vector<1x1x1xf32>
    %266 = vector.broadcast %265 : vector<1x1x1xf32> to vector<1x1x128xf32>
    %c0_86 = arith.constant 0 : index
    %c0_87 = arith.constant 0 : index
    %c0_88 = arith.constant 0 : index
    %267 = vector.load %arg14[%c0_86, %c0_87, %c0_88] : memref<1x1x128xf32, #tpu.memory_space<vmem>>, vector<1x1x128xf32>
    tpu.vector_store %arg14[%c0_86, %c0_87, %c0_88], %266 {strides = array<i32>} : memref<1x1x128xf32, #tpu.memory_space<vmem>>, vector<1x1x128xf32>,
    return
  }
  func.func @transform_0(%arg0: i32) -> (i32, i32, i32) {
    %c0_i32 = arith.constant 0 : i32
    %c0_i32_0 = arith.constant 0 : i32
    %c0_i32_1 = arith.constant 0 : i32
    return %arg0, %c0_i32, %c0_i32_0 : i32, i32, i32
  }
  func.func @transform_1(%arg0: i32) -> (i32, i32) {
    %c0_i32 = arith.constant 0 : i32
    %c0_i32_0 = arith.constant 0 : i32
    return %arg0, %c0_i32 : i32, i32
  }
  func.func @transform_2(%arg0: i32) -> (i32, i32) {
    %c0_i32 = arith.constant 0 : i32
    %c0_i32_0 = arith.constant 0 : i32
    return %arg0, %c0_i32 : i32, i32
  }
  func.func @transform_3(%arg0: i32) -> (i32, i32) {
    %c0_i32 = arith.constant 0 : i32
    %c0_i32_0 = arith.constant 0 : i32
    return %arg0, %c0_i32 : i32, i32
  }
  func.func @transform_4(%arg0: i32) -> (i32, i32) {
    %c0_i32 = arith.constant 0 : i32
    %c0_i32_0 = arith.constant 0 : i32
    %c0_i32_1 = arith.constant 0 : i32
    return %c0_i32, %c0_i32_0 : i32, i32
  }
  func.func @transform_5(%arg0: i32) -> (i32, i32) {
    %c0_i32 = arith.constant 0 : i32
    %c0_i32_0 = arith.constant 0 : i32
    %c0_i32_1 = arith.constant 0 : i32
    return %c0_i32, %c0_i32_0 : i32, i32
  }
  func.func @transform_6(%arg0: i32) -> (i32, i32) {
    %c0_i32 = arith.constant 0 : i32
    %c0_i32_0 = arith.constant 0 : i32
    %c0_i32_1 = arith.constant 0 : i32
    return %c0_i32, %c0_i32_0 : i32, i32
  }
  func.func @transform_7(%arg0: i32) -> (i32, i32) {
    %c0_i32 = arith.constant 0 : i32
    %c0_i32_0 = arith.constant 0 : i32
    %c0_i32_1 = arith.constant 0 : i32
    return %c0_i32, %c0_i32_0 : i32, i32
  }
  func.func @transform_8(%arg0: i32) -> (i32, i32) {
    %c0_i32 = arith.constant 0 : i32
    %c0_i32_0 = arith.constant 0 : i32
    %c0_i32_1 = arith.constant 0 : i32
    return %c0_i32, %c0_i32_0 : i32, i32
  }
  func.func @transform_9(%arg0: i32) -> (i32, i32) {
    %c0_i32 = arith.constant 0 : i32
    %c0_i32_0 = arith.constant 0 : i32
    %c0_i32_1 = arith.constant 0 : i32
    return %c0_i32, %c0_i32_0 : i32, i32
  }
  func.func @transform_10(%arg0: i32) -> (i32, i32) {
    %c0_i32 = arith.constant 0 : i32
    %c0_i32_0 = arith.constant 0 : i32
    %c0_i32_1 = arith.constant 0 : i32
    return %c0_i32, %c0_i32_0 : i32, i32
  }
  func.func @transform_11(%arg0: i32) -> (i32, i32) {
    %c0_i32 = arith.constant 0 : i32
    %c0_i32_0 = arith.constant 0 : i32
    %c0_i32_1 = arith.constant 0 : i32
    return %c0_i32, %c0_i32_0 : i32, i32
  }
  func.func @transform_12(%arg0: i32) -> (i32, i32, i32) {
    %c0_i32 = arith.constant 0 : i32
    %c0_i32_0 = arith.constant 0 : i32
    %c0_i32_1 = arith.constant 0 : i32
    return %arg0, %c0_i32, %c0_i32_0 : i32, i32, i32
  }
  func.func @transform_13(%arg0: i32) -> (i32, i32, i32) {
    %c0_i32 = arith.constant 0 : i32
    %c0_i32_0 = arith.constant 0 : i32
    %c0_i32_1 = arith.constant 0 : i32
    return %arg0, %c0_i32, %c0_i32_0 : i32, i32, i32
  }
}

</mosaic_0001>

<llo_original>
// kernel: tpu_custom_call.1
$region0: #{tpu_custom_call.1}
  #allocation0 [shape = 'u32[]', space=smem, size = 0x4, offset = 0x4, fixed_abs, tag = 'smem constant byte address 0x4 - core index']
  #allocation1 [shape = 'u32[144,128]{1,0:T(1,128)}', space=vmem, size = 0x12000, scoped, tag = 'internal scratch']
  %s0 = inlined_call_operand.hbm [shape: bf16[32,8,32], index: 0, kind: input, shape index: {}]
  %s1 = inlined_call_operand.vmem [shape: f32[32,8], index: 1, kind: input, shape index: {}]
  %s2 = inlined_call_operand.vmem [shape: s32[32,8], index: 2, kind: input, shape index: {}]
  %s3 = inlined_call_operand.vmem [shape: s32[32,8], index: 3, kind: input, shape index: {}]
  %s4 = inlined_call_operand.vmem [shape: bf16[32,32], index: 4, kind: input, shape index: {}]
  %s5 = inlined_call_operand.vmem [shape: f32[1,32], index: 5, kind: input, shape index: {}]
  %s6 = inlined_call_operand.vmem [shape: bf16[32,64], index: 6, kind: input, shape index: {}]
  %s7 = inlined_call_operand.vmem [shape: f32[1,64], index: 7, kind: input, shape index: {}]
  %s8 = inlined_call_operand.vmem [shape: bf16[32,128], index: 8, kind: input, shape index: {}]
  %s9 = inlined_call_operand.vmem [shape: f32[1,128], index: 9, kind: input, shape index: {}]
  %s10 = inlined_call_operand.vmem [shape: bf16[32,128], index: 10, kind: input, shape index: {}]
  %s11 = inlined_call_operand.vmem [shape: f32[1,128], index: 11, kind: input, shape index: {}]
  %s12 = inlined_call_operand.hbm [shape: f32[2,1,128], index: 12, kind: output, shape index: {0}]
  %s13 = inlined_call_operand.hbm [shape: f32[2,1,128], index: 13, kind: output, shape index: {1}]
  %14 = xla_tuple %s12, %s13
  %s15 = sld [smem:[#allocation0]]
  $region93: #{tpu_custom_call.1} parent=0
    _
  %s17 = ssub.s32 1, %s15
  %s18 = scalar_select 0, %s17, %s15
  $region1: #{tpu_custom_call.1} parent=0
    #allocation2 [shape = 'u8[65536]{0}', space=vmem, size = 0x10000, scoped, tag = 'input window, operand 0']
    #allocation3 [shape = 's32[2]{0}', space=sflag, size = 0x8, scoped, tag = 'scoped memory for tpu_custom_call.1']
    #allocation4 [shape = 's32[2]{0}', space=sflag, size = 0x8, scoped, tag = 'scoped memory for tpu_custom_call.1']
    #allocation5 [shape = 'u8[1024]{0}', space=vmem, size = 0x400, scoped, tag = 'output window, operand 0']
    #allocation6 [shape = 'u8[1024]{0}', space=vmem, size = 0x400, scoped, tag = 'output window, operand 1']
    #allocation7 [shape = 's32[2]{0}', space=sflag, size = 0x8, scoped, tag = 'scoped memory for tpu_custom_call.1']
    %19 = vsyncpa [#allocation3], 0
    %s20 = scalar_lea.sflag [#allocation3], 1
    %21 = vsyncpa %s20, 0
    %22 = vsyncpa [#allocation4], 0
    %s23 = scalar_lea.sflag [#allocation4], 1
    %24 = vsyncpa %s23, 0
    %25 = vsyncpa [#allocation7], 0
    %s26 = scalar_lea.sflag [#allocation7], 1
    %27 = vsyncpa %s26, 0
    loop: start=0, step=1, limit=4
    $region2: #{tpu_custom_call.1} parent=1 // loop_pre_header
      _
    $region3: #{tpu_custom_call.1} parent=1 // loop_header
      %s29 = sphi 0, %s33
      %p30 = scmp.ge.s32.totalorder %s29, 4
      %s39 = sphi 0, %s41
      %s42 = sphi 0, %s39
      %s43 = sphi 0, %s42
      %s59 = sphi 0, %s43
      %s65 = sphi 0, %s67
      %s68 = sphi 0, %s65
      %s69 = sphi 0, %s68
      %s85 = sphi 0, %s69
      %s91 = sphi 0, %s93
      %s94 = sphi 0, %s91
      %s95 = sphi 0, %s94
      %s111 = sphi 0, %s95
      %s117 = sphi 0, %s119
      %s120 = sphi 0, %s117
      %s121 = sphi 0, %s120
      %s137 = sphi 0, %s121
      %s141 = sphi 0, %s141
      %s143 = sphi 0, %s141
      %s144 = sphi 0, %s143
      %s158 = sphi 0, %s144
      %s162 = sphi 0, %s162
      %s164 = sphi 0, %s162
      %s165 = sphi 0, %s164
      %s179 = sphi 0, %s165
      %s183 = sphi 0, %s183
      %s185 = sphi 0, %s183
      %s186 = sphi 0, %s185
      %s200 = sphi 0, %s186
      %s204 = sphi 0, %s204
      %s206 = sphi 0, %s204
      %s207 = sphi 0, %s206
      %s221 = sphi 0, %s207
      %s225 = sphi 0, %s225
      %s227 = sphi 0, %s225
      %s228 = sphi 0, %s227
      %s242 = sphi 0, %s228
      %s246 = sphi 0, %s246
      %s248 = sphi 0, %s246
      %s249 = sphi 0, %s248
      %s263 = sphi 0, %s249
      %s267 = sphi 0, %s267
      %s269 = sphi 0, %s267
      %s270 = sphi 0, %s269
      %s284 = sphi 0, %s270
      %s288 = sphi 0, %s288
      %s290 = sphi 0, %s288
      %s291 = sphi 0, %s290
      %s305 = sphi 0, %s291
      %s311 = sphi 0, %s313
      %s314 = sphi 0, %s311
      %s315 = sphi 0, %s314
      %s331 = sphi 0, %s315
      %s337 = sphi 0, %s339
      %s340 = sphi 0, %s337
      %s341 = sphi 0, %s340
      %s357 = sphi 0, %s341
    $region4: #{tpu_custom_call.1} parent=1 // loop_header_branch
      %32 = sbr.rel (%p30) target = $region8
    $region5: #{tpu_custom_call.1} parent=1 // loop_body
      %s34 = ssub.s32 %s29, 1
      %s35 = ssub.s32 %s29, 2
      %s36 = sadd.s32 %s29, 1
      %s37 = ssub.s32 %s29, %s36
      %p38 = scmp.eq.s32.totalorder %s37, 0
      %s40 = sadd.s32 %s39, 1
      %s41 = scalar_select %p38, %s39, %s40
      %p44 = pneg %p38
      %p45 = scmp.eq.s32.totalorder %s29, 1
      %p46 = por %p44, %p45
      %p47 = scmp.ne.s32.totalorder %s39, %s42
      %p48 = scmp.eq.s32.totalorder %s29, 0
      %p49 = por %p47, %p48
      %p50 = scmp.ne.s32.totalorder %s39, %s42
      %p51 = scmp.eq.s32.totalorder %s34, 1
      %p52 = por %p50, %p51
      %p53 = scmp.ne.s32.totalorder %s42, %s43
      %p54 = scmp.eq.s32.totalorder %s34, 0
      %p55 = por %p53, %p54
      %p56 = scmp.ne.s32.totalorder %s42, %s43
      %p57 = scmp.eq.s32.totalorder %s35, 1
      %p58 = por %p56, %p57
      %p60 = scmp.ne.s32.totalorder %s43, %s59
      %p61 = scmp.eq.s32.totalorder %s35, 0
      %p62 = por %p60, %p61
      %s63 = ssub.s32 %s29, %s36
      %p64 = scmp.eq.s32.totalorder %s63, 0
      %s66 = sadd.s32 %s65, 1
      %s67 = scalar_select %p64, %s65, %s66
      %p70 = pneg %p64
      %p71 = scmp.eq.s32.totalorder %s29, 1
      %p72 = por %p70, %p71
      %p73 = scmp.ne.s32.totalorder %s65, %s68
      %p74 = scmp.eq.s32.totalorder %s29, 0
      %p75 = por %p73, %p74
      %p76 = scmp.ne.s32.totalorder %s65, %s68
      %p77 = scmp.eq.s32.totalorder %s34, 1
      %p78 = por %p76, %p77
      %p79 = scmp.ne.s32.totalorder %s68, %s69
      %p80 = scmp.eq.s32.totalorder %s34, 0
      %p81 = por %p79, %p80
      %p82 = scmp.ne.s32.totalorder %s68, %s69
      %p83 = scmp.eq.s32.totalorder %s35, 1
      %p84 = por %p82, %p83
      %p86 = scmp.ne.s32.totalorder %s69, %s85
      %p87 = scmp.eq.s32.totalorder %s35, 0
      %p88 = por %p86, %p87
      %s89 = ssub.s32 %s29, %s36
      %p90 = scmp.eq.s32.totalorder %s89, 0
      %s92 = sadd.s32 %s91, 1
      %s93 = scalar_select %p90, %s91, %s92
      %p96 = pneg %p90
      %p97 = scmp.eq.s32.totalorder %s29, 1
      %p98 = por %p96, %p97
      %p99 = scmp.ne.s32.totalorder %s91, %s94
      %p100 = scmp.eq.s32.totalorder %s29, 0
      %p101 = por %p99, %p100
      %p102 = scmp.ne.s32.totalorder %s91, %s94
      %p103 = scmp.eq.s32.totalorder %s34, 1
      %p104 = por %p102, %p103
      %p105 = scmp.ne.s32.totalorder %s94, %s95
      %p106 = scmp.eq.s32.totalorder %s34, 0
      %p107 = por %p105, %p106
      %p108 = scmp.ne.s32.totalorder %s94, %s95
      %p109 = scmp.eq.s32.totalorder %s35, 1
      %p110 = por %p108, %p109
      %p112 = scmp.ne.s32.totalorder %s95, %s111
      %p113 = scmp.eq.s32.totalorder %s35, 0
      %p114 = por %p112, %p113
      %s115 = ssub.s32 %s29, %s36
      %p116 = scmp.eq.s32.totalorder %s115, 0
      %s118 = sadd.s32 %s117, 1
      %s119 = scalar_select %p116, %s117, %s118
      %p122 = pneg %p116
      %p123 = scmp.eq.s32.totalorder %s29, 1
      %p124 = por %p122, %p123
      %p125 = scmp.ne.s32.totalorder %s117, %s120
      %p126 = scmp.eq.s32.totalorder %s29, 0
      %p127 = por %p125, %p126
      %p128 = scmp.ne.s32.totalorder %s117, %s120
      %p129 = scmp.eq.s32.totalorder %s34, 1
      %p130 = por %p128, %p129
      %p131 = scmp.ne.s32.totalorder %s120, %s121
      %p132 = scmp.eq.s32.totalorder %s34, 0
      %p133 = por %p131, %p132
      %p134 = scmp.ne.s32.totalorder %s120, %s121
      %p135 = scmp.eq.s32.totalorder %s35, 1
      %p136 = por %p134, %p135
      %p138 = scmp.ne.s32.totalorder %s121, %s137
      %p139 = scmp.eq.s32.totalorder %s35, 0
      %p140 = por %p138, %p139
      %s142 = sadd.s32 %s141, 1
      %p145 = scmp.eq.s32.totalorder %s29, 1
      %p146 = scmp.ne.s32.totalorder %s141, %s143
      %p147 = scmp.eq.s32.totalorder %s29, 0
      %p148 = por %p146, %p147
      %p149 = scmp.ne.s32.totalorder %s141, %s143
      %p150 = scmp.eq.s32.totalorder %s34, 1
      %p151 = por %p149, %p150
      %p152 = scmp.ne.s32.totalorder %s143, %s144
      %p153 = scmp.eq.s32.totalorder %s34, 0
      %p154 = por %p152, %p153
      %p155 = scmp.ne.s32.totalorder %s143, %s144
      %p156 = scmp.eq.s32.totalorder %s35, 1
      %p157 = por %p155, %p156
      %p159 = scmp.ne.s32.totalorder %s144, %s158
      %p160 = scmp.eq.s32.totalorder %s35, 0
      %p161 = por %p159, %p160
      %s163 = sadd.s32 %s162, 1
      %p166 = scmp.eq.s32.totalorder %s29, 1
      %p167 = scmp.ne.s32.totalorder %s162, %s164
      %p168 = scmp.eq.s32.totalorder %s29, 0
      %p169 = por %p167, %p168
      %p170 = scmp.ne.s32.totalorder %s162, %s164
      %p171 = scmp.eq.s32.totalorder %s34, 1
      %p172 = por %p170, %p171
      %p173 = scmp.ne.s32.totalorder %s164, %s165
      %p174 = scmp.eq.s32.totalorder %s34, 0
      %p175 = por %p173, %p174
      %p176 = scmp.ne.s32.totalorder %s164, %s165
      %p177 = scmp.eq.s32.totalorder %s35, 1
      %p178 = por %p176, %p177
      %p180 = scmp.ne.s32.totalorder %s165, %s179
      %p181 = scmp.eq.s32.totalorder %s35, 0
      %p182 = por %p180, %p181
      %s184 = sadd.s32 %s183, 1
      %p187 = scmp.eq.s32.totalorder %s29, 1
      %p188 = scmp.ne.s32.totalorder %s183, %s185
      %p189 = scmp.eq.s32.totalorder %s29, 0
      %p190 = por %p188, %p189
      %p191 = scmp.ne.s32.totalorder %s183, %s185
      %p192 = scmp.eq.s32.totalorder %s34, 1
      %p193 = por %p191, %p192
      %p194 = scmp.ne.s32.totalorder %s185, %s186
      %p195 = scmp.eq.s32.totalorder %s34, 0
      %p196 = por %p194, %p195
      %p197 = scmp.ne.s32.totalorder %s185, %s186
      %p198 = scmp.eq.s32.totalorder %s35, 1
      %p199 = por %p197, %p198
      %p201 = scmp.ne.s32.totalorder %s186, %s200
      %p202 = scmp.eq.s32.totalorder %s35, 0
      %p203 = por %p201, %p202
      %s205 = sadd.s32 %s204, 1
      %p208 = scmp.eq.s32.totalorder %s29, 1
      %p209 = scmp.ne.s32.totalorder %s204, %s206
      %p210 = scmp.eq.s32.totalorder %s29, 0
      %p211 = por %p209, %p210
      %p212 = scmp.ne.s32.totalorder %s204, %s206
      %p213 = scmp.eq.s32.totalorder %s34, 1
      %p214 = por %p212, %p213
      %p215 = scmp.ne.s32.totalorder %s206, %s207
      %p216 = scmp.eq.s32.totalorder %s34, 0
      %p217 = por %p215, %p216
      %p218 = scmp.ne.s32.totalorder %s206, %s207
      %p219 = scmp.eq.s32.totalorder %s35, 1
      %p220 = por %p218, %p219
      %p222 = scmp.ne.s32.totalorder %s207, %s221
      %p223 = scmp.eq.s32.totalorder %s35, 0
      %p224 = por %p222, %p223
      %s226 = sadd.s32 %s225, 1
      %p229 = scmp.eq.s32.totalorder %s29, 1
      %p230 = scmp.ne.s32.totalorder %s225, %s227
      %p231 = scmp.eq.s32.totalorder %s29, 0
      %p232 = por %p230, %p231
      %p233 = scmp.ne.s32.totalorder %s225, %s227
      %p234 = scmp.eq.s32.totalorder %s34, 1
      %p235 = por %p233, %p234
      %p236 = scmp.ne.s32.totalorder %s227, %s228
      %p237 = scmp.eq.s32.totalorder %s34, 0
      %p238 = por %p236, %p237
      %p239 = scmp.ne.s32.totalorder %s227, %s228
      %p240 = scmp.eq.s32.totalorder %s35, 1
      %p241 = por %p239, %p240
      %p243 = scmp.ne.s32.totalorder %s228, %s242
      %p244 = scmp.eq.s32.totalorder %s35, 0
      %p245 = por %p243, %p244
      %s247 = sadd.s32 %s246, 1
      %p250 = scmp.eq.s32.totalorder %s29, 1
      %p251 = scmp.ne.s32.totalorder %s246, %s248
      %p252 = scmp.eq.s32.totalorder %s29, 0
      %p253 = por %p251, %p252
      %p254 = scmp.ne.s32.totalorder %s246, %s248
      %p255 = scmp.eq.s32.totalorder %s34, 1
      %p256 = por %p254, %p255
      %p257 = scmp.ne.s32.totalorder %s248, %s249
      %p258 = scmp.eq.s32.totalorder %s34, 0
      %p259 = por %p257, %p258
      %p260 = scmp.ne.s32.totalorder %s248, %s249
      %p261 = scmp.eq.s32.totalorder %s35, 1
      %p262 = por %p260, %p261
      %p264 = scmp.ne.s32.totalorder %s249, %s263
      %p265 = scmp.eq.s32.totalorder %s35, 0
      %p266 = por %p264, %p265
      %s268 = sadd.s32 %s267, 1
      %p271 = scmp.eq.s32.totalorder %s29, 1
      %p272 = scmp.ne.s32.totalorder %s267, %s269
      %p273 = scmp.eq.s32.totalorder %s29, 0
      %p274 = por %p272, %p273
      %p275 = scmp.ne.s32.totalorder %s267, %s269
      %p276 = scmp.eq.s32.totalorder %s34, 1
      %p277 = por %p275, %p276
      %p278 = scmp.ne.s32.totalorder %s269, %s270
      %p279 = scmp.eq.s32.totalorder %s34, 0
      %p280 = por %p278, %p279
      %p281 = scmp.ne.s32.totalorder %s269, %s270
      %p282 = scmp.eq.s32.totalorder %s35, 1
      %p283 = por %p281, %p282
      %p285 = scmp.ne.s32.totalorder %s270, %s284
      %p286 = scmp.eq.s32.totalorder %s35, 0
      %p287 = por %p285, %p286
      %s289 = sadd.s32 %s288, 1
      %p292 = scmp.eq.s32.totalorder %s29, 1
      %p293 = scmp.ne.s32.totalorder %s288, %s290
      %p294 = scmp.eq.s32.totalorder %s29, 0
      %p295 = por %p293, %p294
      %p296 = scmp.ne.s32.totalorder %s288, %s290
      %p297 = scmp.eq.s32.totalorder %s34, 1
      %p298 = por %p296, %p297
      %p299 = scmp.ne.s32.totalorder %s290, %s291
      %p300 = scmp.eq.s32.totalorder %s34, 0
      %p301 = por %p299, %p300
      %p302 = scmp.ne.s32.totalorder %s290, %s291
      %p303 = scmp.eq.s32.totalorder %s35, 1
      %p304 = por %p302, %p303
      %p306 = scmp.ne.s32.totalorder %s291, %s305
      %p307 = scmp.eq.s32.totalorder %s35, 0
      %p308 = por %p306, %p307
      %s309 = ssub.s32 %s29, %s36
      %p310 = scmp.eq.s32.totalorder %s309, 0
      %s312 = sadd.s32 %s311, 1
      %s313 = scalar_select %p310, %s311, %s312
      %p316 = pneg %p310
      %p317 = scmp.eq.s32.totalorder %s29, 1
      %p318 = por %p316, %p317
      %p319 = scmp.ne.s32.totalorder %s311, %s314
      %p320 = scmp.eq.s32.totalorder %s29, 0
      %p321 = por %p319, %p320
      %p322 = scmp.ne.s32.totalorder %s311, %s314
      %p323 = scmp.eq.s32.totalorder %s34, 1
      %p324 = por %p322, %p323
      %p325 = scmp.ne.s32.totalorder %s314, %s315
      %p326 = scmp.eq.s32.totalorder %s34, 0
      %p327 = por %p325, %p326
      %p328 = scmp.ne.s32.totalorder %s314, %s315
      %p329 = scmp.eq.s32.totalorder %s35, 1
      %p330 = por %p328, %p329
      %p332 = scmp.ne.s32.totalorder %s315, %s331
      %p333 = scmp.eq.s32.totalorder %s35, 0
      %p334 = por %p332, %p333
      %s335 = ssub.s32 %s29, %s36
      %p336 = scmp.eq.s32.totalorder %s335, 0
      %s338 = sadd.s32 %s337, 1
      %s339 = scalar_select %p336, %s337, %s338
      %p342 = pneg %p336
      %p343 = scmp.eq.s32.totalorder %s29, 1
      %p344 = por %p342, %p343
      %p345 = scmp.ne.s32.totalorder %s337, %s340
      %p346 = scmp.eq.s32.totalorder %s29, 0
      %p347 = por %p345, %p346
      %p348 = scmp.ne.s32.totalorder %s337, %s340
      %p349 = scmp.eq.s32.totalorder %s34, 1
      %p350 = por %p348, %p349
      %p351 = scmp.ne.s32.totalorder %s340, %s341
      %p352 = scmp.eq.s32.totalorder %s34, 0
      %p353 = por %p351, %p352
      %p354 = scmp.ne.s32.totalorder %s340, %s341
      %p355 = scmp.eq.s32.totalorder %s35, 1
      %p356 = por %p354, %p355
      %p358 = scmp.ne.s32.totalorder %s341, %s357
      %p359 = scmp.eq.s32.totalorder %s35, 0
      %p360 = por %p358, %p359
      %p361 = scmp.le.s32.totalorder 1, %s29
      %p362 = scmp.lt.s32.totalorder %s29, 3
      %p363 = pnand %p361, %p362
      %p364 = pneg %p363
      // Predicated region
      $region9: #{tpu_custom_call.1} parent=5 // pred_check
        _
      $region10: #{tpu_custom_call.1} parent=5 // pred_check_branch
        %366 = sbr.rel (%p363) target = $region12
      $region11: #{tpu_custom_call.1} parent=5 // pred_region
        %s367 = ssub.s32 %s29, 1
        // Predicated region
        $region13: #{tpu_custom_call.1} parent=11 // pred_check
          %p368 = pneg %p154
        $region14: #{tpu_custom_call.1} parent=11 // pred_check_branch
          %370 = sbr.rel (%p368) target = $region16
        $region15: #{tpu_custom_call.1} parent=11 // pred_region
          _
        $region16: #{tpu_custom_call.1} parent=11 // pred_fallthru
          _
        // Predicated region
        $region17: #{tpu_custom_call.1} parent=11 // pred_check
          %p371 = pneg %p175
        $region18: #{tpu_custom_call.1} parent=11 // pred_check_branch
          %373 = sbr.rel (%p371) target = $region20
        $region19: #{tpu_custom_call.1} parent=11 // pred_region
          _
        $region20: #{tpu_custom_call.1} parent=11 // pred_fallthru
          _
        // Predicated region
        $region21: #{tpu_custom_call.1} parent=11 // pred_check
          %p374 = pneg %p196
        $region22: #{tpu_custom_call.1} parent=11 // pred_check_branch
          %376 = sbr.rel (%p374) target = $region24
        $region23: #{tpu_custom_call.1} parent=11 // pred_region
          _
        $region24: #{tpu_custom_call.1} parent=11 // pred_fallthru
          _
        // Predicated region
        $region25: #{tpu_custom_call.1} parent=11 // pred_check
          %p377 = pneg %p217
        $region26: #{tpu_custom_call.1} parent=11 // pred_check_branch
          %379 = sbr.rel (%p377) target = $region28
        $region27: #{tpu_custom_call.1} parent=11 // pred_region
          _
        $region28: #{tpu_custom_call.1} parent=11 // pred_fallthru
          _
        // Predicated region
        $region29: #{tpu_custom_call.1} parent=11 // pred_check
          %p380 = pneg %p238
        $region30: #{tpu_custom_call.1} parent=11 // pred_check_branch
          %382 = sbr.rel (%p380) target = $region32
        $region31: #{tpu_custom_call.1} parent=11 // pred_region
          _
        $region32: #{tpu_custom_call.1} parent=11 // pred_fallthru
          _
        // Predicated region
        $region33: #{tpu_custom_call.1} parent=11 // pred_check
          %p383 = pneg %p259
        $region34: #{tpu_custom_call.1} parent=11 // pred_check_branch
          %385 = sbr.rel (%p383) target = $region36
        $region35: #{tpu_custom_call.1} parent=11 // pred_region
          _
        $region36: #{tpu_custom_call.1} parent=11 // pred_fallthru
          _
        // Predicated region
        $region37: #{tpu_custom_call.1} parent=11 // pred_check
          %p386 = pneg %p280
        $region38: #{tpu_custom_call.1} parent=11 // pred_check_branch
          %388 = sbr.rel (%p386) target = $region40
        $region39: #{tpu_custom_call.1} parent=11 // pred_region
          _
        $region40: #{tpu_custom_call.1} parent=11 // pred_fallthru
          _
        // Predicated region
        $region41: #{tpu_custom_call.1} parent=11 // pred_check
          %p389 = pneg %p301
        $region42: #{tpu_custom_call.1} parent=11 // pred_check_branch
          %391 = sbr.rel (%p389) target = $region44
        $region43: #{tpu_custom_call.1} parent=11 // pred_region
          _
        $region44: #{tpu_custom_call.1} parent=11 // pred_fallthru
          _
      $region12: #{tpu_custom_call.1} parent=5 // pred_fallthru
        _
      %p392 = scmp.lt.s32.totalorder %s29, 2
      // Predicated region
      $region45: #{tpu_custom_call.1} parent=5 // pred_check
        %p393 = pneg %p392
      $region46: #{tpu_custom_call.1} parent=5 // pred_check_branch
        %395 = sbr.rel (%p393) target = $region48
      $region47: #{tpu_custom_call.1} parent=5 // pred_region
        // Predicated region
        $region49: #{tpu_custom_call.1} parent=47 // pred_check
          %p396 = pneg %p49
        $region50: #{tpu_custom_call.1} parent=47 // pred_check_branch
          %398 = sbr.rel (%p396) target = $region52
        $region51: #{tpu_custom_call.1} parent=47 // pred_region
          %s399 = sand.u32 %s39, 1
          %s400 = scalar_lea.sflag [#allocation3], %s399
          %s401 = sand.u32 %s39, 1
          %s402 = smul.addr %s401, 64
          %s403 = scalar_lea.vmem [#allocation2], %s402
          %s404 = smul.u32 16, %s29
          %s406 = ssub.s32 1024, 1024
          %407 = vsyncadd %s400, %s406
          %s408 = smul.addr %s404, 64
          %s409 = scalar_lea.hbm %s0, %s408
          %s410 = sshll.u32 %s403, 4
          %s411 = int_to_ptr.vmem [resolvable:$true] %s410
          %416 = dma.hbm_to_vmem [thread:$0]  %s409, 1024, %s411, %s400, 64, 64, 4
        $region52: #{tpu_custom_call.1} parent=47 // pred_fallthru
          _
        // Predicated region
        $region53: #{tpu_custom_call.1} parent=47 // pred_check
          %p417 = pneg %p75
        $region54: #{tpu_custom_call.1} parent=47 // pred_check_branch
          %419 = sbr.rel (%p417) target = $region56
        $region55: #{tpu_custom_call.1} parent=47 // pred_region
          %s420 = smul.u32 2, %s29
          %p421 = scmp.lt.s32.totalorder %s420, 3
          %s422 = scalar_select %p421, %s420, 3
          %s423 = smul.addr %s422, 8
          %s424 = scalar_lea.vmem %s1, %s423
          %s425 = smul.u32 2, %s29
        $region56: #{tpu_custom_call.1} parent=47 // pred_fallthru
          _
        // Predicated region
        $region57: #{tpu_custom_call.1} parent=47 // pred_check
          %p426 = pneg %p101
        $region58: #{tpu_custom_call.1} parent=47 // pred_check_branch
          %428 = sbr.rel (%p426) target = $region60
        $region59: #{tpu_custom_call.1} parent=47 // pred_region
          %s429 = smul.u32 2, %s29
          %p430 = scmp.lt.s32.totalorder %s429, 3
          %s431 = scalar_select %p430, %s429, 3
          %s432 = smul.addr %s431, 8
          %s433 = scalar_lea.vmem %s2, %s432
          %s434 = smul.u32 2, %s29
        $region60: #{tpu_custom_call.1} parent=47 // pred_fallthru
          _
        // Predicated region
        $region61: #{tpu_custom_call.1} parent=47 // pred_check
          %p435 = pneg %p127
        $region62: #{tpu_custom_call.1} parent=47 // pred_check_branch
          %437 = sbr.rel (%p435) target = $region64
        $region63: #{tpu_custom_call.1} parent=47 // pred_region
          %s438 = smul.u32 2, %s29
          %p439 = scmp.lt.s32.totalorder %s438, 3
          %s440 = scalar_select %p439, %s438, 3
          %s441 = smul.addr %s440, 8
          %s442 = scalar_lea.vmem %s3, %s441
          %s443 = smul.u32 2, %s29
        $region64: #{tpu_custom_call.1} parent=47 // pred_fallthru
          _
      $region48: #{tpu_custom_call.1} parent=5 // pred_fallthru
        _
      %p444 = scmp.le.s32.totalorder 1, %s29
      %p445 = scmp.lt.s32.totalorder %s29, 3
      %p446 = pnand %p444, %p445
      %p447 = pneg %p446
      // Predicated region
      $region65: #{tpu_custom_call.1} parent=5 // pred_check
        _
      $region66: #{tpu_custom_call.1} parent=5 // pred_check_branch
        %449 = sbr.rel (%p446) target = $region68
      $region67: #{tpu_custom_call.1} parent=5 // pred_region
        %s450 = ssub.s32 %s29, 1
        %s451 = sand.u32 %s42, 1
        %s452 = scalar_lea.sflag [#allocation3], %s451
        %s453 = sand.u32 %s42, 1
        %s454 = smul.addr %s453, 64
        %s455 = scalar_lea.vmem [#allocation2], %s454
        // Predicated region
        $region69: #{tpu_custom_call.1} parent=67 // pred_check
          %p456 = pneg %p55
        $region70: #{tpu_custom_call.1} parent=67 // pred_check_branch
          %458 = sbr.rel (%p456) target = $region72
        $region71: #{tpu_custom_call.1} parent=67 // pred_region
          %459 = dma.done %s452, 1024
        $region72: #{tpu_custom_call.1} parent=67 // pred_fallthru
          _
        %s460 = sand.u32 %s42, 1
        %s461 = scalar_lea.sflag [#allocation3], %s460
        %s462 = sand.u32 %s42, 1
        %s463 = smul.addr %s462, 64
        %s464 = scalar_lea.vmem [#allocation2], %s463
        %p465 = pneg %p55
        %p466 = pneg %p52
        %s467 = smul.u32 2, %s34
        %p468 = scmp.lt.s32.totalorder %s467, 3
        %s469 = scalar_select %p468, %s467, 3
        %s470 = smul.addr %s469, 8
        %s471 = scalar_lea.vmem %s1, %s470
        %p472 = pneg %p81
        %p473 = pneg %p78
        %s474 = smul.u32 2, %s34
        %p475 = scmp.lt.s32.totalorder %s474, 3
        %s476 = scalar_select %p475, %s474, 3
        %s477 = smul.addr %s476, 8
        %s478 = scalar_lea.vmem %s2, %s477
        %p479 = pneg %p107
        %p480 = pneg %p104
        %s481 = smul.u32 2, %s34
        %p482 = scmp.lt.s32.totalorder %s481, 3
        %s483 = scalar_select %p482, %s481, 3
        %s484 = smul.addr %s483, 8
        %s485 = scalar_lea.vmem %s3, %s484
        %p486 = pneg %p133
        %p487 = pneg %p130
        %p488 = pneg %p154
        %p489 = pneg %p151
        %p490 = pneg %p175
        %p491 = pneg %p172
        %p492 = pneg %p196
        %p493 = pneg %p193
        %p494 = pneg %p217
        %p495 = pneg %p214
        %p496 = pneg %p238
        %p497 = pneg %p235
        %p498 = pneg %p259
        %p499 = pneg %p256
        %p500 = pneg %p280
        %p501 = pneg %p277
        %p502 = pneg %p301
        %p503 = pneg %p298
        %p504 = pneg %p327
        %p505 = pneg %p324
        %s506 = sand.u32 %s314, 1
        %s507 = scalar_lea.sflag [#allocation4], %s506
        %s508 = sand.u32 %s314, 1
        %s509 = scalar_lea.vmem [#allocation5], %s508
        %p510 = pneg %p353
        %p511 = pneg %p350
        %s512 = sand.u32 %s340, 1
        %s513 = scalar_lea.sflag [#allocation7], %s512
        %s514 = sand.u32 %s340, 1
        %s515 = scalar_lea.vmem [#allocation6], %s514
        %s516 = smul.u32 16, %s34
        %s517 = smul.u32 2, %s34
        %p518 = scmp.lt.s32.totalorder %s517, 3
        %s519 = scalar_select %p518, %s517, 3
        %s520 = smul.addr %s519, 8
        %s521 = scalar_lea.vmem %s1, %s520
        %s522 = smul.u32 2, %s34
        %s523 = smul.u32 2, %s34
        %p524 = scmp.lt.s32.totalorder %s523, 3
        %s525 = scalar_select %p524, %s523, 3
        %s526 = smul.addr %s525, 8
        %s527 = scalar_lea.vmem %s2, %s526
        %s528 = smul.u32 2, %s34
        %s529 = smul.u32 2, %s34
        %p530 = scmp.lt.s32.totalorder %s529, 3
        %s531 = scalar_select %p530, %s529, 3
        %s532 = smul.addr %s531, 8
        %s533 = scalar_lea.vmem %s3, %s532
        %s534 = smul.u32 2, %s34
        %v536 = vld [vmem:[%s521] sm:$0xff]
        %v537 = vld [vmem:[%s521 + $0x8] sm:$0xff]
        %vm538 = vcmask 64512
        %v539 = vsel %vm538, %v536, 0.0
        %540 = vadd.xlane.f32.xlu0 %v539
        %v541 = vpop.xlane.xlu0 %540
        %v542 = vsel %vm538, %v537, 0.0
        %543 = vadd.xlane.f32.xlu0 %v542
        %v544 = vpop.xlane.xlu0 %543
        %v545 = vmax.f32 %v541, 1.0
        %v546 = vmax.f32 %v544, 1.0
        %v547 = vrcp.pop %v545
        %v548 = vrcp.pop %v546
        %v549 = vmul.f32 %v536, %v547
        %v550 = vmul.f32 %v537, %v548
        %v551 = vld [vmem:[%s455] sm:$0xf]
        %v552 = vld [vmem:[%s455 + $0x4] sm:$0xf]
        %v553 = vld [vmem:[%s455 + $0x8] sm:$0xf]
        %v554 = vld [vmem:[%s455 + $0xc] sm:$0xf]
        %v555 = vld [vmem:[%s455 + $0x10] sm:$0xf]
        %v556 = vld [vmem:[%s455 + $0x14] sm:$0xf]
        %v557 = vld [vmem:[%s455 + $0x18] sm:$0xf]
        %v558 = vld [vmem:[%s455 + $0x1c] sm:$0xf]
        %v559 = vld [vmem:[%s455 + $0x20] sm:$0xf]
        %v560 = vld [vmem:[%s455 + $0x24] sm:$0xf]
        %v561 = vld [vmem:[%s455 + $0x28] sm:$0xf]
        %v562 = vld [vmem:[%s455 + $0x2c] sm:$0xf]
        %v563 = vld [vmem:[%s455 + $0x30] sm:$0xf]
        %v564 = vld [vmem:[%s455 + $0x34] sm:$0xf]
        %v565 = vld [vmem:[%s455 + $0x38] sm:$0xf]
        %v566 = vld [vmem:[%s455 + $0x3c] sm:$0xf]
        %v567 = vunpack.c.l.bf16 %v551
        %v568 = vunpack.c.l.bf16 %v552
        %v569 = vunpack.c.l.bf16 %v553
        %v570 = vunpack.c.l.bf16 %v554
        %v571 = vunpack.c.l.bf16 %v555
        %v572 = vunpack.c.l.bf16 %v556
        %v573 = vunpack.c.l.bf16 %v557
        %v574 = vunpack.c.l.bf16 %v558
        %v575 = vunpack.c.l.bf16 %v559
        %v576 = vunpack.c.l.bf16 %v560
        %v577 = vunpack.c.l.bf16 %v561
        %v578 = vunpack.c.l.bf16 %v562
        %v579 = vunpack.c.l.bf16 %v563
        %v580 = vunpack.c.l.bf16 %v564
        %v581 = vunpack.c.l.bf16 %v565
        %v582 = vunpack.c.l.bf16 %v566
        %v583 = vlaneseq
        %v584 = vshrl.u32 %v583, 7
        %v585 = vsub.s32 0, %v584
        %v586 = vrot.slane %v549, %v585
        %588 = vbcast.lane.b32.xlu0 %v586, 256
        %v589 = vpop.permute.xlu0 %588
        %v590 = vlaneseq
        %v591 = vshrl.u32 %v590, 7
        %v592 = vsub.s32 1, %v591
        %v593 = vrot.slane %v549, %v592
        %595 = vbcast.lane.b32.xlu0 %v593, 256
        %v596 = vpop.permute.xlu0 %595
        %v597 = vlaneseq
        %v598 = vshrl.u32 %v597, 7
        %v599 = vsub.s32 2, %v598
        %v600 = vrot.slane %v549, %v599
        %602 = vbcast.lane.b32.xlu0 %v600, 256
        %v603 = vpop.permute.xlu0 %602
        %v604 = vlaneseq
        %v605 = vshrl.u32 %v604, 7
        %v606 = vsub.s32 3, %v605
        %v607 = vrot.slane %v549, %v606
        %609 = vbcast.lane.b32.xlu0 %v607, 256
        %v610 = vpop.permute.xlu0 %609
        %v611 = vlaneseq
        %v612 = vshrl.u32 %v611, 7
        %v613 = vsub.s32 4, %v612
        %v614 = vrot.slane %v549, %v613
        %616 = vbcast.lane.b32.xlu0 %v614, 256
        %v617 = vpop.permute.xlu0 %616
        %v618 = vlaneseq
        %v619 = vshrl.u32 %v618, 7
        %v620 = vsub.s32 5, %v619
        %v621 = vrot.slane %v549, %v620
        %623 = vbcast.lane.b32.xlu0 %v621, 256
        %v624 = vpop.permute.xlu0 %623
        %v625 = vlaneseq
        %v626 = vshrl.u32 %v625, 7
        %v627 = vsub.s32 6, %v626
        %v628 = vrot.slane %v549, %v627
        %630 = vbcast.lane.b32.xlu0 %v628, 256
        %v631 = vpop.permute.xlu0 %630
        %v632 = vlaneseq
        %v633 = vshrl.u32 %v632, 7
        %v634 = vsub.s32 7, %v633
        %v635 = vrot.slane %v549, %v634
        %637 = vbcast.lane.b32.xlu0 %v635, 256
        %v638 = vpop.permute.xlu0 %637
        %v639 = vlaneseq
        %v640 = vshrl.u32 %v639, 7
        %v641 = vsub.s32 0, %v640
        %v642 = vrot.slane %v550, %v641
        %644 = vbcast.lane.b32.xlu0 %v642, 256
        %v645 = vpop.permute.xlu0 %644
        %v646 = vlaneseq
        %v647 = vshrl.u32 %v646, 7
        %v648 = vsub.s32 1, %v647
        %v649 = vrot.slane %v550, %v648
        %651 = vbcast.lane.b32.xlu0 %v649, 256
        %v652 = vpop.permute.xlu0 %651
        %v653 = vlaneseq
        %v654 = vshrl.u32 %v653, 7
        %v655 = vsub.s32 2, %v654
        %v656 = vrot.slane %v550, %v655
        %658 = vbcast.lane.b32.xlu0 %v656, 256
        %v659 = vpop.permute.xlu0 %658
        %v660 = vlaneseq
        %v661 = vshrl.u32 %v660, 7
        %v662 = vsub.s32 3, %v661
        %v663 = vrot.slane %v550, %v662
        %665 = vbcast.lane.b32.xlu0 %v663, 256
        %v666 = vpop.permute.xlu0 %665
        %v667 = vlaneseq
        %v668 = vshrl.u32 %v667, 7
        %v669 = vsub.s32 4, %v668
        %v670 = vrot.slane %v550, %v669
        %672 = vbcast.lane.b32.xlu0 %v670, 256
        %v673 = vpop.permute.xlu0 %672
        %v674 = vlaneseq
        %v675 = vshrl.u32 %v674, 7
        %v676 = vsub.s32 5, %v675
        %v677 = vrot.slane %v550, %v676
        %679 = vbcast.lane.b32.xlu0 %v677, 256
        %v680 = vpop.permute.xlu0 %679
        %v681 = vlaneseq
        %v682 = vshrl.u32 %v681, 7
        %v683 = vsub.s32 6, %v682
        %v684 = vrot.slane %v550, %v683
        %686 = vbcast.lane.b32.xlu0 %v684, 256
        %v687 = vpop.permute.xlu0 %686
        %v688 = vlaneseq
        %v689 = vshrl.u32 %v688, 7
        %v690 = vsub.s32 7, %v689
        %v691 = vrot.slane %v550, %v690
        %693 = vbcast.lane.b32.xlu0 %v691, 256
        %v694 = vpop.permute.xlu0 %693
        %v695 = vmul.f32 %v567, %v589
        %v696 = vmul.f32 %v568, %v596
        %v697 = vmul.f32 %v569, %v603
        %v698 = vmul.f32 %v570, %v610
        %v699 = vmul.f32 %v571, %v617
        %v700 = vmul.f32 %v572, %v624
        %v701 = vmul.f32 %v573, %v631
        %v702 = vmul.f32 %v574, %v638
        %v703 = vmul.f32 %v575, %v645
        %v704 = vmul.f32 %v576, %v652
        %v705 = vmul.f32 %v577, %v659
        %v706 = vmul.f32 %v578, %v666
        %v707 = vmul.f32 %v579, %v673
        %v708 = vmul.f32 %v580, %v680
        %v709 = vmul.f32 %v581, %v687
        %v710 = vmul.f32 %v582, %v694
        %vm711 = vcmask 261120
        %v712 = vsel %vm711, %v695, 0.0
        %v713 = vrot.slane %v712, 4
        %v714 = vadd.f32 %v712, %v713
        %v715 = vrot.slane %v714, 2
        %v716 = vadd.f32 %v714, %v715
        %v717 = vrot.slane %v716, 1
        %v718 = vadd.f32 %v716, %v717
        %v719 = vsel %vm711, %v696, 0.0
        %v720 = vrot.slane %v719, 4
        %v721 = vadd.f32 %v719, %v720
        %v722 = vrot.slane %v721, 2
        %v723 = vadd.f32 %v721, %v722
        %v724 = vrot.slane %v723, 1
        %v725 = vadd.f32 %v723, %v724
        %v726 = vsel %vm711, %v697, 0.0
        %v727 = vrot.slane %v726, 4
        %v728 = vadd.f32 %v726, %v727
        %v729 = vrot.slane %v728, 2
        %v730 = vadd.f32 %v728, %v729
        %v731 = vrot.slane %v730, 1
        %v732 = vadd.f32 %v730, %v731
        %v733 = vsel %vm711, %v698, 0.0
        %v734 = vrot.slane %v733, 4
        %v735 = vadd.f32 %v733, %v734
        %v736 = vrot.slane %v735, 2
        %v737 = vadd.f32 %v735, %v736
        %v738 = vrot.slane %v737, 1
        %v739 = vadd.f32 %v737, %v738
        %v740 = vsel %vm711, %v699, 0.0
        %v741 = vrot.slane %v740, 4
        %v742 = vadd.f32 %v740, %v741
        %v743 = vrot.slane %v742, 2
        %v744 = vadd.f32 %v742, %v743
        %v745 = vrot.slane %v744, 1
        %v746 = vadd.f32 %v744, %v745
        %v747 = vsel %vm711, %v700, 0.0
        %v748 = vrot.slane %v747, 4
        %v749 = vadd.f32 %v747, %v748
        %v750 = vrot.slane %v749, 2
        %v751 = vadd.f32 %v749, %v750
        %v752 = vrot.slane %v751, 1
        %v753 = vadd.f32 %v751, %v752
        %v754 = vsel %vm711, %v701, 0.0
        %v755 = vrot.slane %v754, 4
        %v756 = vadd.f32 %v754, %v755
        %v757 = vrot.slane %v756, 2
        %v758 = vadd.f32 %v756, %v757
        %v759 = vrot.slane %v758, 1
        %v760 = vadd.f32 %v758, %v759
        %v761 = vsel %vm711, %v702, 0.0
        %v762 = vrot.slane %v761, 4
        %v763 = vadd.f32 %v761, %v762
        %v764 = vrot.slane %v763, 2
        %v765 = vadd.f32 %v763, %v764
        %v766 = vrot.slane %v765, 1
        %v767 = vadd.f32 %v765, %v766
        %v768 = vsel %vm711, %v703, 0.0
        %v769 = vrot.slane %v768, 4
        %v770 = vadd.f32 %v768, %v769
        %v771 = vrot.slane %v770, 2
        %v772 = vadd.f32 %v770, %v771
        %v773 = vrot.slane %v772, 1
        %v774 = vadd.f32 %v772, %v773
        %v775 = vsel %vm711, %v704, 0.0
        %v776 = vrot.slane %v775, 4
        %v777 = vadd.f32 %v775, %v776
        %v778 = vrot.slane %v777, 2
        %v779 = vadd.f32 %v777, %v778
        %v780 = vrot.slane %v779, 1
        %v781 = vadd.f32 %v779, %v780
        %v782 = vsel %vm711, %v705, 0.0
        %v783 = vrot.slane %v782, 4
        %v784 = vadd.f32 %v782, %v783
        %v785 = vrot.slane %v784, 2
        %v786 = vadd.f32 %v784, %v785
        %v787 = vrot.slane %v786, 1
        %v788 = vadd.f32 %v786, %v787
        %v789 = vsel %vm711, %v706, 0.0
        %v790 = vrot.slane %v789, 4
        %v791 = vadd.f32 %v789, %v790
        %v792 = vrot.slane %v791, 2
        %v793 = vadd.f32 %v791, %v792
        %v794 = vrot.slane %v793, 1
        %v795 = vadd.f32 %v793, %v794
        %v796 = vsel %vm711, %v707, 0.0
        %v797 = vrot.slane %v796, 4
        %v798 = vadd.f32 %v796, %v797
        %v799 = vrot.slane %v798, 2
        %v800 = vadd.f32 %v798, %v799
        %v801 = vrot.slane %v800, 1
        %v802 = vadd.f32 %v800, %v801
        %v803 = vsel %vm711, %v708, 0.0
        %v804 = vrot.slane %v803, 4
        %v805 = vadd.f32 %v803, %v804
        %v806 = vrot.slane %v805, 2
        %v807 = vadd.f32 %v805, %v806
        %v808 = vrot.slane %v807, 1
        %v809 = vadd.f32 %v807, %v808
        %v810 = vsel %vm711, %v709, 0.0
        %v811 = vrot.slane %v810, 4
        %v812 = vadd.f32 %v810, %v811
        %v813 = vrot.slane %v812, 2
        %v814 = vadd.f32 %v812, %v813
        %v815 = vrot.slane %v814, 1
        %v816 = vadd.f32 %v814, %v815
        %v817 = vsel %vm711, %v710, 0.0
        %v818 = vrot.slane %v817, 4
        %v819 = vadd.f32 %v817, %v818
        %v820 = vrot.slane %v819, 2
        %v821 = vadd.f32 %v819, %v820
        %v822 = vrot.slane %v821, 1
        %v823 = vadd.f32 %v821, %v822
        %v824 = vpack.c.bf16 %v718, %v718
        %v825 = vpack.c.bf16 %v725, %v725
        %v826 = vpack.c.bf16 %v732, %v732
        %v827 = vpack.c.bf16 %v739, %v739
        %v828 = vpack.c.bf16 %v746, %v746
        %v829 = vpack.c.bf16 %v753, %v753
        %v830 = vpack.c.bf16 %v760, %v760
        %v831 = vpack.c.bf16 %v767, %v767
        %v832 = vpack.c.bf16 %v774, %v774
        %v833 = vpack.c.bf16 %v781, %v781
        %v834 = vpack.c.bf16 %v788, %v788
        %v835 = vpack.c.bf16 %v795, %v795
        %v836 = vpack.c.bf16 %v802, %v802
        %v837 = vpack.c.bf16 %v809, %v809
        %v838 = vpack.c.bf16 %v816, %v816
        %v839 = vpack.c.bf16 %v823, %v823
        %v840 = vld [vmem:[%s4] sm:$0xf]
        %v841 = vld [vmem:[%s4 + $0x4] sm:$0xf]
        %v842 = vld [vmem:[%s4 + $0x8] sm:$0xf]
        %v843 = vld [vmem:[%s4 + $0xc] sm:$0xf]
        %v844 = vld [vmem:[%s5] sm:$0x1]
        %v846 = vlaneseq
        %v847 = vshrl.u32 %v846, 7
        %v848 = vsub.s32 0, %v847
        %v849 = vrot.slane %v844, %v848
        %v867 = vunpack.c.l.b16 %v824
        %v868 = vunpack.c.l.b16 %v825
        %v869 = vunpack.c.l.b16 %v826
        %v870 = vunpack.c.l.b16 %v827
        %v871 = vunpack.c.l.b16 %v828
        %v872 = vunpack.c.l.b16 %v829
        %v873 = vunpack.c.l.b16 %v830
        %v874 = vunpack.c.l.b16 %v831
        %v875 = vunpack.c.l.b16 %v832
        %v876 = vunpack.c.l.b16 %v833
        %v877 = vunpack.c.l.b16 %v834
        %v878 = vunpack.c.l.b16 %v835
        %v879 = vunpack.c.l.b16 %v836
        %v880 = vunpack.c.l.b16 %v837
        %v881 = vunpack.c.l.b16 %v838
        %v882 = vunpack.c.l.b16 %v839
        %vm883 = vcmask 1041409
        %v884 = vsel %vm883, %v868, %v867
        %vm885 = vcmask 1042434
        %v886 = vsel %vm885, %v869, %v884
        %vm887 = vcmask 1043459
        %v888 = vsel %vm887, %v870, %v886
        %vm889 = vcmask 1044484
        %v890 = vsel %vm889, %v871, %v888
        %vm891 = vcmask 1045509
        %v892 = vsel %vm891, %v872, %v890
        %vm893 = vcmask 1046534
        %v894 = vsel %vm893, %v873, %v892
        %vm895 = vcmask 1047559
        %v896 = vsel %vm895, %v874, %v894
        %v897 = vsel %vm883, %v876, %v875
        %v898 = vsel %vm885, %v877, %v897
        %v899 = vsel %vm887, %v878, %v898
        %v900 = vsel %vm889, %v879, %v899
        %v901 = vsel %vm891, %v880, %v900
        %v902 = vsel %vm893, %v881, %v901
        %v903 = vsel %vm895, %v882, %v902
        %v904 = vpack.c.b16 %v903, %v896
        %v909 = vunpack.c.l.b16 %v840
        %v910 = vunpack.c.l.b16 %v841
        %v911 = vunpack.c.l.b16 %v842
        %v912 = vunpack.c.l.b16 %v843
        %v913 = vpack.c.b16 %v910, %v909
        %v914 = vpack.c.b16 %v912, %v911
        %v918 = vsel %vm711, %v904, 0
        %920 = vmatprep.subr.bf16.mxu0 0
        %921 = vmatpush1.bf16.msra.mxu0 %v913
        %922 = vmatprep.subr.bf16.mxu0 0
        %923 = vmatpush1.bf16.msra.mxu0 %v914
        %924 = vmatprep.subr.bf16.mxu0 0
        %925 = vmatpush1.bf16.msra.mxu0 0
        %926 = vmatprep.subr.bf16.mxu0 0
        %927 = vmatpush1.bf16.msra.mxu0 0
        %928 = vmatprep.subr.bf16.mxu0 0
        %929 = vmatpush1.bf16.msra.mxu0 0
        %930 = vmatprep.subr.bf16.mxu0 0
        %931 = vmatpush1.bf16.msra.mxu0 0
        %932 = vmatprep.subr.bf16.mxu0 0
        %933 = vmatpush1.bf16.msra.mxu0 0
        %934 = vmatprep.subr.bf16.mxu0 0
        %935 = vmatpush1.bf16.msra.mxu0 0
        %936 = vmatprep.subr.bf16.mxu0 0
        %937 = vmatpush1.bf16.msra.mxu0 0
        %938 = vmatprep.subr.bf16.mxu0 0
        %939 = vmatpush1.bf16.msra.mxu0 0
        %940 = vmatprep.subr.bf16.mxu0 0
        %941 = vmatpush1.bf16.msra.mxu0 0
        %942 = vmatprep.subr.bf16.mxu0 0
        %943 = vmatpush1.bf16.msra.mxu0 0
        %944 = vmatprep.subr.bf16.mxu0 0
        %945 = vmatpush1.bf16.msra.mxu0 0
        %946 = vmatprep.subr.bf16.mxu0 0
        %947 = vmatpush1.bf16.msra.mxu0 0
        %948 = vmatprep.subr.bf16.mxu0 0
        %949 = vmatpush1.bf16.msra.mxu0 0
        %950 = vmatprep.subr.bf16.mxu0 0
        %951 = vmatpush1.bf16.msra.mxu0 0
        %952 = vmatprep.mubr.bf16.mxu0 0
        %953 = vmatmul.mubr.bf16.gmra.mrb[0].mxu0 %v918
        %v954 = vpop.f32.mrb[0].mxu0
        %v955 = vadd.f32 %v849, %v954
        %v956 = vpop.f32.mrb[0].mxu0
        %v957 = vpop.f32.mrb[0].mxu0
        %v958 = vadd.f32 %v849, %v957
        %v959 = vpop.f32.mrb[0].mxu0
        %960 = vdwg.mxu0
        %v961 = vtanh.pop %v955
        %v962 = vtanh.pop %v958
        %v963 = vpack.c.bf16 %v962, %v961
        %v964 = vld [vmem:[%s6] sm:$0xf]
        %v965 = vld [vmem:[%s6 + $0x4] sm:$0xf]
        %v966 = vld [vmem:[%s6 + $0x8] sm:$0xf]
        %v967 = vld [vmem:[%s6 + $0xc] sm:$0xf]
        %v968 = vld [vmem:[%s7] sm:$0x1]
        %v970 = vlaneseq
        %v971 = vshrl.u32 %v970, 7
        %v972 = vsub.s32 0, %v971
        %v973 = vrot.slane %v968, %v972
        %v979 = vunpack.c.l.b16 %v964
        %v980 = vunpack.c.l.b16 %v965
        %v981 = vunpack.c.l.b16 %v966
        %v982 = vunpack.c.l.b16 %v967
        %v983 = vpack.c.b16 %v980, %v979
        %v984 = vpack.c.b16 %v982, %v981
        %v988 = vsel %vm711, %v963, 0
        %990 = vmatprep.subr.bf16.mxu0 0
        %991 = vmatpush1.bf16.msra.mxu0 %v983
        %992 = vmatprep.subr.bf16.mxu0 0
        %993 = vmatpush1.bf16.msra.mxu0 %v984
        %994 = vmatprep.subr.bf16.mxu0 0
        %995 = vmatpush1.bf16.msra.mxu0 0
        %996 = vmatprep.subr.bf16.mxu0 0
        %997 = vmatpush1.bf16.msra.mxu0 0
        %998 = vmatprep.subr.bf16.mxu0 0
        %999 = vmatpush1.bf16.msra.mxu0 0
        %1000 = vmatprep.subr.bf16.mxu0 0
        %1001 = vmatpush1.bf16.msra.mxu0 0
        %1002 = vmatprep.subr.bf16.mxu0 0
        %1003 = vmatpush1.bf16.msra.mxu0 0
        %1004 = vmatprep.subr.bf16.mxu0 0
        %1005 = vmatpush1.bf16.msra.mxu0 0
        %1006 = vmatprep.subr.bf16.mxu0 0
        %1007 = vmatpush1.bf16.msra.mxu0 0
        %1008 = vmatprep.subr.bf16.mxu0 0
        %1009 = vmatpush1.bf16.msra.mxu0 0
        %1010 = vmatprep.subr.bf16.mxu0 0
        %1011 = vmatpush1.bf16.msra.mxu0 0
        %1012 = vmatprep.subr.bf16.mxu0 0
        %1013 = vmatpush1.bf16.msra.mxu0 0
        %1014 = vmatprep.subr.bf16.mxu0 0
        %1015 = vmatpush1.bf16.msra.mxu0 0
        %1016 = vmatprep.subr.bf16.mxu0 0
        %1017 = vmatpush1.bf16.msra.mxu0 0
        %1018 = vmatprep.subr.bf16.mxu0 0
        %1019 = vmatpush1.bf16.msra.mxu0 0
        %1020 = vmatprep.subr.bf16.mxu0 0
        %1021 = vmatpush1.bf16.msra.mxu0 0
        %1022 = vmatprep.mubr.bf16.mxu0 0
        %1023 = vmatmul.mubr.bf16.gmra.mrb[0].mxu0 %v988
        %v1024 = vpop.f32.mrb[0].mxu0
        %v1025 = vadd.f32 %v973, %v1024
        %v1026 = vpop.f32.mrb[0].mxu0
        %v1027 = vpop.f32.mrb[0].mxu0
        %v1028 = vadd.f32 %v973, %v1027
        %v1029 = vpop.f32.mrb[0].mxu0
        %1030 = vdwg.mxu0
        %v1031 = vmax.f32 %v1025, 0.0
        %v1032 = vmax.f32 %v1028, 0.0
        %v1033 = vpack.c.bf16 %v1032, %v1031
        %v1034 = vld [vmem:[%s8] sm:$0xf]
        %v1035 = vld [vmem:[%s8 + $0x4] sm:$0xf]
        %v1036 = vld [vmem:[%s8 + $0x8] sm:$0xf]
        %v1037 = vld [vmem:[%s8 + $0xc] sm:$0xf]
        %v1038 = vld [vmem:[%s9] sm:$0x1]
        %v1040 = vlaneseq
        %v1041 = vshrl.u32 %v1040, 7
        %v1042 = vsub.s32 0, %v1041
        %v1043 = vrot.slane %v1038, %v1042
        %v1049 = vunpack.c.l.b16 %v1034
        %v1050 = vunpack.c.l.b16 %v1035
        %v1051 = vunpack.c.l.b16 %v1036
        %v1052 = vunpack.c.l.b16 %v1037
        %v1053 = vpack.c.b16 %v1050, %v1049
        %v1054 = vpack.c.b16 %v1052, %v1051
        %v1058 = vsel %vm711, %v1033, 0
        %1060 = vmatprep.subr.bf16.mxu0 0
        %1061 = vmatpush1.bf16.msra.mxu0 %v1053
        %1062 = vmatprep.subr.bf16.mxu0 0
        %1063 = vmatpush1.bf16.msra.mxu0 %v1054
        %1064 = vmatprep.subr.bf16.mxu0 0
        %1065 = vmatpush1.bf16.msra.mxu0 0
        %1066 = vmatprep.subr.bf16.mxu0 0
        %1067 = vmatpush1.bf16.msra.mxu0 0
        %1068 = vmatprep.subr.bf16.mxu0 0
        %1069 = vmatpush1.bf16.msra.mxu0 0
        %1070 = vmatprep.subr.bf16.mxu0 0
        %1071 = vmatpush1.bf16.msra.mxu0 0
        %1072 = vmatprep.subr.bf16.mxu0 0
        %1073 = vmatpush1.bf16.msra.mxu0 0
        %1074 = vmatprep.subr.bf16.mxu0 0
        %1075 = vmatpush1.bf16.msra.mxu0 0
        %1076 = vmatprep.subr.bf16.mxu0 0
        %1077 = vmatpush1.bf16.msra.mxu0 0
        %1078 = vmatprep.subr.bf16.mxu0 0
        %1079 = vmatpush1.bf16.msra.mxu0 0
        %1080 = vmatprep.subr.bf16.mxu0 0
        %1081 = vmatpush1.bf16.msra.mxu0 0
        %1082 = vmatprep.subr.bf16.mxu0 0
        %1083 = vmatpush1.bf16.msra.mxu0 0
        %1084 = vmatprep.subr.bf16.mxu0 0
        %1085 = vmatpush1.bf16.msra.mxu0 0
        %1086 = vmatprep.subr.bf16.mxu0 0
        %1087 = vmatpush1.bf16.msra.mxu0 0
        %1088 = vmatprep.subr.bf16.mxu0 0
        %1089 = vmatpush1.bf16.msra.mxu0 0
        %1090 = vmatprep.subr.bf16.mxu0 0
        %1091 = vmatpush1.bf16.msra.mxu0 0
        %1092 = vmatprep.mubr.bf16.mxu0 0
        %1093 = vmatmul.mubr.bf16.gmra.mrb[0].mxu0 %v1058
        %v1094 = vpop.f32.mrb[0].mxu0
        %v1095 = vadd.f32 %v1043, %v1094
        %v1096 = vpop.f32.mrb[0].mxu0
        %v1097 = vpop.f32.mrb[0].mxu0
        %v1098 = vadd.f32 %v1043, %v1097
        %v1099 = vpop.f32.mrb[0].mxu0
        %1100 = vdwg.mxu0
        %v1101 = vld [vmem:[%s10] sm:$0xf]
        %v1102 = vld [vmem:[%s10 + $0x4] sm:$0xf]
        %v1103 = vld [vmem:[%s10 + $0x8] sm:$0xf]
        %v1104 = vld [vmem:[%s10 + $0xc] sm:$0xf]
        %v1105 = vld [vmem:[%s11] sm:$0x1]
        %v1107 = vlaneseq
        %v1108 = vshrl.u32 %v1107, 7
        %v1109 = vsub.s32 0, %v1108
        %v1110 = vrot.slane %v1105, %v1109
        %1113 = vrot.lane.b32.xlu0 %v1033, 96
        %v1114 = vpop.permute.xlu0 %1113
        %v1119 = vunpack.c.l.b16 %v1101
        %v1120 = vunpack.c.l.b16 %v1102
        %v1121 = vunpack.c.l.b16 %v1103
        %v1122 = vunpack.c.l.b16 %v1104
        %v1123 = vpack.c.b16 %v1120, %v1119
        %v1124 = vpack.c.b16 %v1122, %v1121
        %v1128 = vsel %vm711, %v1114, 0
        %1130 = vmatprep.subr.bf16.mxu0 0
        %1131 = vmatpush1.bf16.msra.mxu0 %v1123
        %1132 = vmatprep.subr.bf16.mxu0 0
        %1133 = vmatpush1.bf16.msra.mxu0 %v1124
        %1134 = vmatprep.subr.bf16.mxu0 0
        %1135 = vmatpush1.bf16.msra.mxu0 0
        %1136 = vmatprep.subr.bf16.mxu0 0
        %1137 = vmatpush1.bf16.msra.mxu0 0
        %1138 = vmatprep.subr.bf16.mxu0 0
        %1139 = vmatpush1.bf16.msra.mxu0 0
        %1140 = vmatprep.subr.bf16.mxu0 0
        %1141 = vmatpush1.bf16.msra.mxu0 0
        %1142 = vmatprep.subr.bf16.mxu0 0
        %1143 = vmatpush1.bf16.msra.mxu0 0
        %1144 = vmatprep.subr.bf16.mxu0 0
        %1145 = vmatpush1.bf16.msra.mxu0 0
        %1146 = vmatprep.subr.bf16.mxu0 0
        %1147 = vmatpush1.bf16.msra.mxu0 0
        %1148 = vmatprep.subr.bf16.mxu0 0
        %1149 = vmatpush1.bf16.msra.mxu0 0
        %1150 = vmatprep.subr.bf16.mxu0 0
        %1151 = vmatpush1.bf16.msra.mxu0 0
        %1152 = vmatprep.subr.bf16.mxu0 0
        %1153 = vmatpush1.bf16.msra.mxu0 0
        %1154 = vmatprep.subr.bf16.mxu0 0
        %1155 = vmatpush1.bf16.msra.mxu0 0
        %1156 = vmatprep.subr.bf16.mxu0 0
        %1157 = vmatpush1.bf16.msra.mxu0 0
        %1158 = vmatprep.subr.bf16.mxu0 0
        %1159 = vmatpush1.bf16.msra.mxu0 0
        %1160 = vmatprep.subr.bf16.mxu0 0
        %1161 = vmatpush1.bf16.msra.mxu0 0
        %1162 = vmatprep.mubr.bf16.mxu0 0
        %1163 = vmatmul.mubr.bf16.gmra.mrb[0].mxu0 %v1128
        %v1164 = vpop.f32.mrb[0].mxu0
        %v1165 = vadd.f32 %v1110, %v1164
        %v1166 = vpop.f32.mrb[0].mxu0
        %v1167 = vpop.f32.mrb[0].mxu0
        %v1168 = vadd.f32 %v1110, %v1167
        %v1169 = vpop.f32.mrb[0].mxu0
        %1170 = vdwg.mxu0
        %v1171 = vlaneseq
        %v1172 = vand.u32 %v1171, 127
        %v1173 = vld [vmem:[%s527] sm:$0xff]
        %v1174 = vld [vmem:[%s527 + $0x8] sm:$0xff]
        %1175 = vmax.xlane.f32.xlu0 %v1095
        %v1176 = vpop.xlane.xlu0 %1175
        %1177 = vmax.xlane.f32.xlu0 %v1098
        %v1178 = vpop.xlane.xlu0 %1177
        %v1179 = vsub.f32 %v1095, %v1176
        %v1180 = vsub.f32 %v1098, %v1178
        %v1181 = vmul.f32 %v1179, 1.442695
        %v1182 = vpow.pop %v1181
        %v1183 = vmul.f32 %v1180, 1.442695
        %v1184 = vpow.pop %v1183
        %1185 = vadd.xlane.f32.xlu0 %v1182
        %v1186 = vpop.xlane.xlu0 %1185
        %1187 = vadd.xlane.f32.xlu0 %v1184
        %v1188 = vpop.xlane.xlu0 %1187
        %v1189 = vlog2.pop %v1186
        %v1190 = vmul.f32 %v1189, 0.6931472
        %v1191 = vlog2.pop %v1188
        %v1192 = vmul.f32 %v1191, 0.6931472
        %v1193 = vadd.f32 %v1176, %v1190
        %v1194 = vadd.f32 %v1178, %v1192
        %vm1195 = vcmp.eq.s32.totalorder %v1172, 0
        %v1196 = vsel %vm1195, %v1173, 0
        %v1197 = vsel %vm1195, %v1174, 0
        %v1198 = vsel %vm538, %v1196, 0
        %v1199 = vand.u32 %v1198, 65535
        %v1200 = vshrl.u32 %v1198, 16
        %v1201 = vcvt.s32.f32 %v1199
        %v1202 = vcvt.s32.f32 %v1200
        %1203 = vadd.xlane.f32.xlu0 %v1201
        %v1204 = vpop.xlane.xlu0 %1203
        %1205 = vadd.xlane.f32.xlu0 %v1202
        %v1206 = vpop.xlane.xlu0 %1205
        %v1207 = vcvt.f32.s32 %v1204
        %v1208 = vcvt.f32.s32 %v1206
        %v1209 = vshll.u32 %v1208, 16
        %v1210 = vadd.s32 %v1209, %v1207
        %v1211 = vsel %vm538, %v1197, 0
        %v1212 = vand.u32 %v1211, 65535
        %v1213 = vshrl.u32 %v1211, 16
        %v1214 = vcvt.s32.f32 %v1212
        %v1215 = vcvt.s32.f32 %v1213
        %1216 = vadd.xlane.f32.xlu0 %v1214
        %v1217 = vpop.xlane.xlu0 %1216
        %1218 = vadd.xlane.f32.xlu0 %v1215
        %v1219 = vpop.xlane.xlu0 %1218
        %v1220 = vcvt.f32.s32 %v1217
        %v1221 = vcvt.f32.s32 %v1219
        %v1222 = vshll.u32 %v1221, 16
        %v1223 = vadd.s32 %v1222, %v1220
        %vm1224 = vcmp.eq.s32.totalorder %v1172, %v1210
        %vm1225 = vcmp.eq.s32.totalorder %v1172, %v1223
        %v1226 = vsel %vm1224, 1, 0
        %v1227 = vsel %vm1225, 1, 0
        %vm1228 = vcmp.eq.s32.totalorder %v1172, 1
        %v1229 = vsel %vm1228, %v1173, 0
        %v1230 = vsel %vm1228, %v1174, 0
        %v1231 = vsel %vm538, %v1229, 0
        %v1232 = vand.u32 %v1231, 65535
        %v1233 = vshrl.u32 %v1231, 16
        %v1234 = vcvt.s32.f32 %v1232
        %v1235 = vcvt.s32.f32 %v1233
        %1236 = vadd.xlane.f32.xlu0 %v1234
        %v1237 = vpop.xlane.xlu0 %1236
        %1238 = vadd.xlane.f32.xlu0 %v1235
        %v1239 = vpop.xlane.xlu0 %1238
        %v1240 = vcvt.f32.s32 %v1237
        %v1241 = vcvt.f32.s32 %v1239
        %v1242 = vshll.u32 %v1241, 16
        %v1243 = vadd.s32 %v1242, %v1240
        %v1244 = vsel %vm538, %v1230, 0
        %v1245 = vand.u32 %v1244, 65535
        %v1246 = vshrl.u32 %v1244, 16
        %v1247 = vcvt.s32.f32 %v1245
        %v1248 = vcvt.s32.f32 %v1246
        %1249 = vadd.xlane.f32.xlu0 %v1247
        %v1250 = vpop.xlane.xlu0 %1249
        %1251 = vadd.xlane.f32.xlu0 %v1248
        %v1252 = vpop.xlane.xlu0 %1251
        %v1253 = vcvt.f32.s32 %v1250
        %v1254 = vcvt.f32.s32 %v1252
        %v1255 = vshll.u32 %v1254, 16
        %v1256 = vadd.s32 %v1255, %v1253
        %vm1257 = vcmp.eq.s32.totalorder %v1172, %v1243
        %vm1258 = vcmp.eq.s32.totalorder %v1172, %v1256
        %v1259 = vsel %vm1257, 1, 0
        %v1260 = vsel %vm1258, 1, 0
        %v1261 = vadd.s32 %v1226, %v1259
        %v1262 = vadd.s32 %v1227, %v1260
        %vm1263 = vcmp.eq.s32.totalorder %v1172, 2
        %v1264 = vsel %vm1263, %v1173, 0
        %v1265 = vsel %vm1263, %v1174, 0
        %v1266 = vsel %vm538, %v1264, 0
        %v1267 = vand.u32 %v1266, 65535
        %v1268 = vshrl.u32 %v1266, 16
        %v1269 = vcvt.s32.f32 %v1267
        %v1270 = vcvt.s32.f32 %v1268
        %1271 = vadd.xlane.f32.xlu0 %v1269
        %v1272 = vpop.xlane.xlu0 %1271
        %1273 = vadd.xlane.f32.xlu0 %v1270
        %v1274 = vpop.xlane.xlu0 %1273
        %v1275 = vcvt.f32.s32 %v1272
        %v1276 = vcvt.f32.s32 %v1274
        %v1277 = vshll.u32 %v1276, 16
        %v1278 = vadd.s32 %v1277, %v1275
        %v1279 = vsel %vm538, %v1265, 0
        %v1280 = vand.u32 %v1279, 65535
        %v1281 = vshrl.u32 %v1279, 16
        %v1282 = vcvt.s32.f32 %v1280
        %v1283 = vcvt.s32.f32 %v1281
        %1284 = vadd.xlane.f32.xlu0 %v1282
        %v1285 = vpop.xlane.xlu0 %1284
        %1286 = vadd.xlane.f32.xlu0 %v1283
        %v1287 = vpop.xlane.xlu0 %1286
        %v1288 = vcvt.f32.s32 %v1285
        %v1289 = vcvt.f32.s32 %v1287
        %v1290 = vshll.u32 %v1289, 16
        %v1291 = vadd.s32 %v1290, %v1288
        %vm1292 = vcmp.eq.s32.totalorder %v1172, %v1278
        %vm1293 = vcmp.eq.s32.totalorder %v1172, %v1291
        %v1294 = vsel %vm1292, 1, 0
        %v1295 = vsel %vm1293, 1, 0
        %v1296 = vadd.s32 %v1261, %v1294
        %v1297 = vadd.s32 %v1262, %v1295
        %vm1298 = vcmp.eq.s32.totalorder %v1172, 3
        %v1299 = vsel %vm1298, %v1173, 0
        %v1300 = vsel %vm1298, %v1174, 0
        %v1301 = vsel %vm538, %v1299, 0
        %v1302 = vand.u32 %v1301, 65535
        %v1303 = vshrl.u32 %v1301, 16
        %v1304 = vcvt.s32.f32 %v1302
        %v1305 = vcvt.s32.f32 %v1303
        %1306 = vadd.xlane.f32.xlu0 %v1304
        %v1307 = vpop.xlane.xlu0 %1306
        %1308 = vadd.xlane.f32.xlu0 %v1305
        %v1309 = vpop.xlane.xlu0 %1308
        %v1310 = vcvt.f32.s32 %v1307
        %v1311 = vcvt.f32.s32 %v1309
        %v1312 = vshll.u32 %v1311, 16
        %v1313 = vadd.s32 %v1312, %v1310
        %v1314 = vsel %vm538, %v1300, 0
        %v1315 = vand.u32 %v1314, 65535
        %v1316 = vshrl.u32 %v1314, 16
        %v1317 = vcvt.s32.f32 %v1315
        %v1318 = vcvt.s32.f32 %v1316
        %1319 = vadd.xlane.f32.xlu0 %v1317
        %v1320 = vpop.xlane.xlu0 %1319
        %1321 = vadd.xlane.f32.xlu0 %v1318
        %v1322 = vpop.xlane.xlu0 %1321
        %v1323 = vcvt.f32.s32 %v1320
        %v1324 = vcvt.f32.s32 %v1322
        %v1325 = vshll.u32 %v1324, 16
        %v1326 = vadd.s32 %v1325, %v1323
        %vm1327 = vcmp.eq.s32.totalorder %v1172, %v1313
        %vm1328 = vcmp.eq.s32.totalorder %v1172, %v1326
        %v1329 = vsel %vm1327, 1, 0
        %v1330 = vsel %vm1328, 1, 0
        %v1331 = vadd.s32 %v1296, %v1329
        %v1332 = vadd.s32 %v1297, %v1330
        %vm1333 = vcmp.eq.s32.totalorder %v1172, 4
        %v1334 = vsel %vm1333, %v1173, 0
        %v1335 = vsel %vm1333, %v1174, 0
        %v1336 = vsel %vm538, %v1334, 0
        %v1337 = vand.u32 %v1336, 65535
        %v1338 = vshrl.u32 %v1336, 16
        %v1339 = vcvt.s32.f32 %v1337
        %v1340 = vcvt.s32.f32 %v1338
        %1341 = vadd.xlane.f32.xlu0 %v1339
        %v1342 = vpop.xlane.xlu0 %1341
        %1343 = vadd.xlane.f32.xlu0 %v1340
        %v1344 = vpop.xlane.xlu0 %1343
        %v1345 = vcvt.f32.s32 %v1342
        %v1346 = vcvt.f32.s32 %v1344
        %v1347 = vshll.u32 %v1346, 16
        %v1348 = vadd.s32 %v1347, %v1345
        %v1349 = vsel %vm538, %v1335, 0
        %v1350 = vand.u32 %v1349, 65535
        %v1351 = vshrl.u32 %v1349, 16
        %v1352 = vcvt.s32.f32 %v1350
        %v1353 = vcvt.s32.f32 %v1351
        %1354 = vadd.xlane.f32.xlu0 %v1352
        %v1355 = vpop.xlane.xlu0 %1354
        %1356 = vadd.xlane.f32.xlu0 %v1353
        %v1357 = vpop.xlane.xlu0 %1356
        %v1358 = vcvt.f32.s32 %v1355
        %v1359 = vcvt.f32.s32 %v1357
        %v1360 = vshll.u32 %v1359, 16
        %v1361 = vadd.s32 %v1360, %v1358
        %vm1362 = vcmp.eq.s32.totalorder %v1172, %v1348
        %vm1363 = vcmp.eq.s32.totalorder %v1172, %v1361
        %v1364 = vsel %vm1362, 1, 0
        %v1365 = vsel %vm1363, 1, 0
        %v1366 = vadd.s32 %v1331, %v1364
        %v1367 = vadd.s32 %v1332, %v1365
        %vm1368 = vcmp.eq.s32.totalorder %v1172, 5
        %v1369 = vsel %vm1368, %v1173, 0
        %v1370 = vsel %vm1368, %v1174, 0
        %v1371 = vsel %vm538, %v1369, 0
        %v1372 = vand.u32 %v1371, 65535
        %v1373 = vshrl.u32 %v1371, 16
        %v1374 = vcvt.s32.f32 %v1372
        %v1375 = vcvt.s32.f32 %v1373
        %1376 = vadd.xlane.f32.xlu0 %v1374
        %v1377 = vpop.xlane.xlu0 %1376
        %1378 = vadd.xlane.f32.xlu0 %v1375
        %v1379 = vpop.xlane.xlu0 %1378
        %v1380 = vcvt.f32.s32 %v1377
        %v1381 = vcvt.f32.s32 %v1379
        %v1382 = vshll.u32 %v1381, 16
        %v1383 = vadd.s32 %v1382, %v1380
        %v1384 = vsel %vm538, %v1370, 0
        %v1385 = vand.u32 %v1384, 65535
        %v1386 = vshrl.u32 %v1384, 16
        %v1387 = vcvt.s32.f32 %v1385
        %v1388 = vcvt.s32.f32 %v1386
        %1389 = vadd.xlane.f32.xlu0 %v1387
        %v1390 = vpop.xlane.xlu0 %1389
        %1391 = vadd.xlane.f32.xlu0 %v1388
        %v1392 = vpop.xlane.xlu0 %1391
        %v1393 = vcvt.f32.s32 %v1390
        %v1394 = vcvt.f32.s32 %v1392
        %v1395 = vshll.u32 %v1394, 16
        %v1396 = vadd.s32 %v1395, %v1393
        %vm1397 = vcmp.eq.s32.totalorder %v1172, %v1383
        %vm1398 = vcmp.eq.s32.totalorder %v1172, %v1396
        %v1399 = vsel %vm1397, 1, 0
        %v1400 = vsel %vm1398, 1, 0
        %v1401 = vadd.s32 %v1366, %v1399
        %v1402 = vadd.s32 %v1367, %v1400
        %vm1403 = vcmp.eq.s32.totalorder %v1172, 6
        %v1404 = vsel %vm1403, %v1173, 0
        %v1405 = vsel %vm1403, %v1174, 0
        %v1406 = vsel %vm538, %v1404, 0
        %v1407 = vand.u32 %v1406, 65535
        %v1408 = vshrl.u32 %v1406, 16
        %v1409 = vcvt.s32.f32 %v1407
        %v1410 = vcvt.s32.f32 %v1408
        %1411 = vadd.xlane.f32.xlu0 %v1409
        %v1412 = vpop.xlane.xlu0 %1411
        %1413 = vadd.xlane.f32.xlu0 %v1410
        %v1414 = vpop.xlane.xlu0 %1413
        %v1415 = vcvt.f32.s32 %v1412
        %v1416 = vcvt.f32.s32 %v1414
        %v1417 = vshll.u32 %v1416, 16
        %v1418 = vadd.s32 %v1417, %v1415
        %v1419 = vsel %vm538, %v1405, 0
        %v1420 = vand.u32 %v1419, 65535
        %v1421 = vshrl.u32 %v1419, 16
        %v1422 = vcvt.s32.f32 %v1420
        %v1423 = vcvt.s32.f32 %v1421
        %1424 = vadd.xlane.f32.xlu0 %v1422
        %v1425 = vpop.xlane.xlu0 %1424
        %1426 = vadd.xlane.f32.xlu0 %v1423
        %v1427 = vpop.xlane.xlu0 %1426
        %v1428 = vcvt.f32.s32 %v1425
        %v1429 = vcvt.f32.s32 %v1427
        %v1430 = vshll.u32 %v1429, 16
        %v1431 = vadd.s32 %v1430, %v1428
        %vm1432 = vcmp.eq.s32.totalorder %v1172, %v1418
        %vm1433 = vcmp.eq.s32.totalorder %v1172, %v1431
        %v1434 = vsel %vm1432, 1, 0
        %v1435 = vsel %vm1433, 1, 0
        %v1436 = vadd.s32 %v1401, %v1434
        %v1437 = vadd.s32 %v1402, %v1435
        %vm1438 = vcmp.eq.s32.totalorder %v1172, 7
        %v1439 = vsel %vm1438, %v1173, 0
        %v1440 = vsel %vm1438, %v1174, 0
        %v1441 = vsel %vm538, %v1439, 0
        %v1442 = vand.u32 %v1441, 65535
        %v1443 = vshrl.u32 %v1441, 16
        %v1444 = vcvt.s32.f32 %v1442
        %v1445 = vcvt.s32.f32 %v1443
        %1446 = vadd.xlane.f32.xlu0 %v1444
        %v1447 = vpop.xlane.xlu0 %1446
        %1448 = vadd.xlane.f32.xlu0 %v1445
        %v1449 = vpop.xlane.xlu0 %1448
        %v1450 = vcvt.f32.s32 %v1447
        %v1451 = vcvt.f32.s32 %v1449
        %v1452 = vshll.u32 %v1451, 16
        %v1453 = vadd.s32 %v1452, %v1450
        %v1454 = vsel %vm538, %v1440, 0
        %v1455 = vand.u32 %v1454, 65535
        %v1456 = vshrl.u32 %v1454, 16
        %v1457 = vcvt.s32.f32 %v1455
        %v1458 = vcvt.s32.f32 %v1456
        %1459 = vadd.xlane.f32.xlu0 %v1457
        %v1460 = vpop.xlane.xlu0 %1459
        %1461 = vadd.xlane.f32.xlu0 %v1458
        %v1462 = vpop.xlane.xlu0 %1461
        %v1463 = vcvt.f32.s32 %v1460
        %v1464 = vcvt.f32.s32 %v1462
        %v1465 = vshll.u32 %v1464, 16
        %v1466 = vadd.s32 %v1465, %v1463
        %vm1467 = vcmp.eq.s32.totalorder %v1172, %v1453
        %vm1468 = vcmp.eq.s32.totalorder %v1172, %v1466
        %v1469 = vsel %vm1467, 1, 0
        %v1470 = vsel %vm1468, 1, 0
        %v1471 = vadd.s32 %v1436, %v1469
        %v1472 = vadd.s32 %v1437, %v1470
        %v1473 = vcvt.s32.f32 %v1471
        %v1474 = vcvt.s32.f32 %v1472
        %v1475 = vmul.f32 %v1473, %v1095
        %v1476 = vmul.f32 %v1474, %v1098
        %v1477 = vadd.f32 %v1475, %v1476
        %1478 = vadd.xlane.f32.xlu0 %v1477
        %v1479 = vpop.xlane.xlu0 %1478
        %v1480 = vrot.slane %v1479, 4
        %v1481 = vadd.f32 %v1479, %v1480
        %v1482 = vrot.slane %v1481, 2
        %v1483 = vadd.f32 %v1481, %v1482
        %v1484 = vrot.slane %v1483, 1
        %v1485 = vadd.f32 %v1483, %v1484
        %s1486 = vtos %v1485
        %v1487 = vstv %s1486
        %v1488 = vmul.f32 %v541, %v1193
        %v1489 = vmul.f32 %v544, %v1194
        %vm1490 = vcmask 7168
        %v1491 = vsel %vm1490, %v1488, 0.0
        %v1492 = vsel %vm1490, %v1489, 0.0
        %v1493 = vadd.f32 %v1491, %v1492
        %1494 = vadd.xlane.f32.xlu0 %v1493
        %v1495 = vpop.xlane.xlu0 %1494
        %v1496 = vrot.slane %v1495, 4
        %v1497 = vadd.f32 %v1495, %v1496
        %v1498 = vrot.slane %v1497, 2
        %v1499 = vadd.f32 %v1497, %v1498
        %v1500 = vrot.slane %v1499, 1
        %v1501 = vadd.f32 %v1499, %v1500
        %s1502 = vtos %v1501
        %v1503 = vstv %s1502
        %v1504 = vsub.f32 %v1503, %v1487
        %v1505 = vld [vmem:[%s533] sm:$0xff]
        %v1506 = vld [vmem:[%s533 + $0x8] sm:$0xff]
        %1507 = vmax.xlane.f32.xlu0 %v1165
        %v1508 = vpop.xlane.xlu0 %1507
        %1509 = vmax.xlane.f32.xlu0 %v1168
        %v1510 = vpop.xlane.xlu0 %1509
        %v1511 = vsub.f32 %v1165, %v1508
        %v1512 = vsub.f32 %v1168, %v1510
        %v1513 = vmul.f32 %v1511, 1.442695
        %v1514 = vpow.pop %v1513
        %v1515 = vmul.f32 %v1512, 1.442695
        %v1516 = vpow.pop %v1515
        %1517 = vadd.xlane.f32.xlu0 %v1514
        %v1518 = vpop.xlane.xlu0 %1517
        %1519 = vadd.xlane.f32.xlu0 %v1516
        %v1520 = vpop.xlane.xlu0 %1519
        %v1521 = vlog2.pop %v1518
        %v1522 = vmul.f32 %v1521, 0.6931472
        %v1523 = vlog2.pop %v1520
        %v1524 = vmul.f32 %v1523, 0.6931472
        %v1525 = vadd.f32 %v1508, %v1522
        %v1526 = vadd.f32 %v1510, %v1524
        %v1527 = vsel %vm1195, %v1505, 0
        %v1528 = vsel %vm1195, %v1506, 0
        %v1529 = vsel %vm538, %v1527, 0
        %v1530 = vand.u32 %v1529, 65535
        %v1531 = vshrl.u32 %v1529, 16
        %v1532 = vcvt.s32.f32 %v1530
        %v1533 = vcvt.s32.f32 %v1531
        %1534 = vadd.xlane.f32.xlu0 %v1532
        %v1535 = vpop.xlane.xlu0 %1534
        %1536 = vadd.xlane.f32.xlu0 %v1533
        %v1537 = vpop.xlane.xlu0 %1536
        %v1538 = vcvt.f32.s32 %v1535
        %v1539 = vcvt.f32.s32 %v1537
        %v1540 = vshll.u32 %v1539, 16
        %v1541 = vadd.s32 %v1540, %v1538
        %v1542 = vsel %vm538, %v1528, 0
        %v1543 = vand.u32 %v1542, 65535
        %v1544 = vshrl.u32 %v1542, 16
        %v1545 = vcvt.s32.f32 %v1543
        %v1546 = vcvt.s32.f32 %v1544
        %1547 = vadd.xlane.f32.xlu0 %v1545
        %v1548 = vpop.xlane.xlu0 %1547
        %1549 = vadd.xlane.f32.xlu0 %v1546
        %v1550 = vpop.xlane.xlu0 %1549
        %v1551 = vcvt.f32.s32 %v1548
        %v1552 = vcvt.f32.s32 %v1550
        %v1553 = vshll.u32 %v1552, 16
        %v1554 = vadd.s32 %v1553, %v1551
        %vm1555 = vcmp.eq.s32.totalorder %v1172, %v1541
        %vm1556 = vcmp.eq.s32.totalorder %v1172, %v1554
        %v1557 = vsel %vm1555, 1, 0
        %v1558 = vsel %vm1556, 1, 0
        %v1559 = vsel %vm1228, %v1505, 0
        %v1560 = vsel %vm1228, %v1506, 0
        %v1561 = vsel %vm538, %v1559, 0
        %v1562 = vand.u32 %v1561, 65535
        %v1563 = vshrl.u32 %v1561, 16
        %v1564 = vcvt.s32.f32 %v1562
        %v1565 = vcvt.s32.f32 %v1563
        %1566 = vadd.xlane.f32.xlu0 %v1564
        %v1567 = vpop.xlane.xlu0 %1566
        %1568 = vadd.xlane.f32.xlu0 %v1565
        %v1569 = vpop.xlane.xlu0 %1568
        %v1570 = vcvt.f32.s32 %v1567
        %v1571 = vcvt.f32.s32 %v1569
        %v1572 = vshll.u32 %v1571, 16
        %v1573 = vadd.s32 %v1572, %v1570
        %v1574 = vsel %vm538, %v1560, 0
        %v1575 = vand.u32 %v1574, 65535
        %v1576 = vshrl.u32 %v1574, 16
        %v1577 = vcvt.s32.f32 %v1575
        %v1578 = vcvt.s32.f32 %v1576
        %1579 = vadd.xlane.f32.xlu0 %v1577
        %v1580 = vpop.xlane.xlu0 %1579
        %1581 = vadd.xlane.f32.xlu0 %v1578
        %v1582 = vpop.xlane.xlu0 %1581
        %v1583 = vcvt.f32.s32 %v1580
        %v1584 = vcvt.f32.s32 %v1582
        %v1585 = vshll.u32 %v1584, 16
        %v1586 = vadd.s32 %v1585, %v1583
        %vm1587 = vcmp.eq.s32.totalorder %v1172, %v1573
        %vm1588 = vcmp.eq.s32.totalorder %v1172, %v1586
        %v1589 = vsel %vm1587, 1, 0
        %v1590 = vsel %vm1588, 1, 0
        %v1591 = vadd.s32 %v1557, %v1589
        %v1592 = vadd.s32 %v1558, %v1590
        %v1593 = vsel %vm1263, %v1505, 0
        %v1594 = vsel %vm1263, %v1506, 0
        %v1595 = vsel %vm538, %v1593, 0
        %v1596 = vand.u32 %v1595, 65535
        %v1597 = vshrl.u32 %v1595, 16
        %v1598 = vcvt.s32.f32 %v1596
        %v1599 = vcvt.s32.f32 %v1597
        %1600 = vadd.xlane.f32.xlu0 %v1598
        %v1601 = vpop.xlane.xlu0 %1600
        %1602 = vadd.xlane.f32.xlu0 %v1599
        %v1603 = vpop.xlane.xlu0 %1602
        %v1604 = vcvt.f32.s32 %v1601
        %v1605 = vcvt.f32.s32 %v1603
        %v1606 = vshll.u32 %v1605, 16
        %v1607 = vadd.s32 %v1606, %v1604
        %v1608 = vsel %vm538, %v1594, 0
        %v1609 = vand.u32 %v1608, 65535
        %v1610 = vshrl.u32 %v1608, 16
        %v1611 = vcvt.s32.f32 %v1609
        %v1612 = vcvt.s32.f32 %v1610
        %1613 = vadd.xlane.f32.xlu0 %v1611
        %v1614 = vpop.xlane.xlu0 %1613
        %1615 = vadd.xlane.f32.xlu0 %v1612
        %v1616 = vpop.xlane.xlu0 %1615
        %v1617 = vcvt.f32.s32 %v1614
        %v1618 = vcvt.f32.s32 %v1616
        %v1619 = vshll.u32 %v1618, 16
        %v1620 = vadd.s32 %v1619, %v1617
        %vm1621 = vcmp.eq.s32.totalorder %v1172, %v1607
        %vm1622 = vcmp.eq.s32.totalorder %v1172, %v1620
        %v1623 = vsel %vm1621, 1, 0
        %v1624 = vsel %vm1622, 1, 0
        %v1625 = vadd.s32 %v1591, %v1623
        %v1626 = vadd.s32 %v1592, %v1624
        %v1627 = vsel %vm1298, %v1505, 0
        %v1628 = vsel %vm1298, %v1506, 0
        %v1629 = vsel %vm538, %v1627, 0
        %v1630 = vand.u32 %v1629, 65535
        %v1631 = vshrl.u32 %v1629, 16
        %v1632 = vcvt.s32.f32 %v1630
        %v1633 = vcvt.s32.f32 %v1631
        %1634 = vadd.xlane.f32.xlu0 %v1632
        %v1635 = vpop.xlane.xlu0 %1634
        %1636 = vadd.xlane.f32.xlu0 %v1633
        %v1637 = vpop.xlane.xlu0 %1636
        %v1638 = vcvt.f32.s32 %v1635
        %v1639 = vcvt.f32.s32 %v1637
        %v1640 = vshll.u32 %v1639, 16
        %v1641 = vadd.s32 %v1640, %v1638
        %v1642 = vsel %vm538, %v1628, 0
        %v1643 = vand.u32 %v1642, 65535
        %v1644 = vshrl.u32 %v1642, 16
        %v1645 = vcvt.s32.f32 %v1643
        %v1646 = vcvt.s32.f32 %v1644
        %1647 = vadd.xlane.f32.xlu0 %v1645
        %v1648 = vpop.xlane.xlu0 %1647
        %1649 = vadd.xlane.f32.xlu0 %v1646
        %v1650 = vpop.xlane.xlu0 %1649
        %v1651 = vcvt.f32.s32 %v1648
        %v1652 = vcvt.f32.s32 %v1650
        %v1653 = vshll.u32 %v1652, 16
        %v1654 = vadd.s32 %v1653, %v1651
        %vm1655 = vcmp.eq.s32.totalorder %v1172, %v1641
        %vm1656 = vcmp.eq.s32.totalorder %v1172, %v1654
        %v1657 = vsel %vm1655, 1, 0
        %v1658 = vsel %vm1656, 1, 0
        %v1659 = vadd.s32 %v1625, %v1657
        %v1660 = vadd.s32 %v1626, %v1658
        %v1661 = vsel %vm1333, %v1505, 0
        %v1662 = vsel %vm1333, %v1506, 0
        %v1663 = vsel %vm538, %v1661, 0
        %v1664 = vand.u32 %v1663, 65535
        %v1665 = vshrl.u32 %v1663, 16
        %v1666 = vcvt.s32.f32 %v1664
        %v1667 = vcvt.s32.f32 %v1665
        %1668 = vadd.xlane.f32.xlu0 %v1666
        %v1669 = vpop.xlane.xlu0 %1668
        %1670 = vadd.xlane.f32.xlu0 %v1667
        %v1671 = vpop.xlane.xlu0 %1670
        %v1672 = vcvt.f32.s32 %v1669
        %v1673 = vcvt.f32.s32 %v1671
        %v1674 = vshll.u32 %v1673, 16
        %v1675 = vadd.s32 %v1674, %v1672
        %v1676 = vsel %vm538, %v1662, 0
        %v1677 = vand.u32 %v1676, 65535
        %v1678 = vshrl.u32 %v1676, 16
        %v1679 = vcvt.s32.f32 %v1677
        %v1680 = vcvt.s32.f32 %v1678
        %1681 = vadd.xlane.f32.xlu0 %v1679
        %v1682 = vpop.xlane.xlu0 %1681
        %1683 = vadd.xlane.f32.xlu0 %v1680
        %v1684 = vpop.xlane.xlu0 %1683
        %v1685 = vcvt.f32.s32 %v1682
        %v1686 = vcvt.f32.s32 %v1684
        %v1687 = vshll.u32 %v1686, 16
        %v1688 = vadd.s32 %v1687, %v1685
        %vm1689 = vcmp.eq.s32.totalorder %v1172, %v1675
        %vm1690 = vcmp.eq.s32.totalorder %v1172, %v1688
        %v1691 = vsel %vm1689, 1, 0
        %v1692 = vsel %vm1690, 1, 0
        %v1693 = vadd.s32 %v1659, %v1691
        %v1694 = vadd.s32 %v1660, %v1692
        %v1695 = vsel %vm1368, %v1505, 0
        %v1696 = vsel %vm1368, %v1506, 0
        %v1697 = vsel %vm538, %v1695, 0
        %v1698 = vand.u32 %v1697, 65535
        %v1699 = vshrl.u32 %v1697, 16
        %v1700 = vcvt.s32.f32 %v1698
        %v1701 = vcvt.s32.f32 %v1699
        %1702 = vadd.xlane.f32.xlu0 %v1700
        %v1703 = vpop.xlane.xlu0 %1702
        %1704 = vadd.xlane.f32.xlu0 %v1701
        %v1705 = vpop.xlane.xlu0 %1704
        %v1706 = vcvt.f32.s32 %v1703
        %v1707 = vcvt.f32.s32 %v1705
        %v1708 = vshll.u32 %v1707, 16
        %v1709 = vadd.s32 %v1708, %v1706
        %v1710 = vsel %vm538, %v1696, 0
        %v1711 = vand.u32 %v1710, 65535
        %v1712 = vshrl.u32 %v1710, 16
        %v1713 = vcvt.s32.f32 %v1711
        %v1714 = vcvt.s32.f32 %v1712
        %1715 = vadd.xlane.f32.xlu0 %v1713
        %v1716 = vpop.xlane.xlu0 %1715
        %1717 = vadd.xlane.f32.xlu0 %v1714
        %v1718 = vpop.xlane.xlu0 %1717
        %v1719 = vcvt.f32.s32 %v1716
        %v1720 = vcvt.f32.s32 %v1718
        %v1721 = vshll.u32 %v1720, 16
        %v1722 = vadd.s32 %v1721, %v1719
        %vm1723 = vcmp.eq.s32.totalorder %v1172, %v1709
        %vm1724 = vcmp.eq.s32.totalorder %v1172, %v1722
        %v1725 = vsel %vm1723, 1, 0
        %v1726 = vsel %vm1724, 1, 0
        %v1727 = vadd.s32 %v1693, %v1725
        %v1728 = vadd.s32 %v1694, %v1726
        %v1729 = vsel %vm1403, %v1505, 0
        %v1730 = vsel %vm1403, %v1506, 0
        %v1731 = vsel %vm538, %v1729, 0
        %v1732 = vand.u32 %v1731, 65535
        %v1733 = vshrl.u32 %v1731, 16
        %v1734 = vcvt.s32.f32 %v1732
        %v1735 = vcvt.s32.f32 %v1733
        %1736 = vadd.xlane.f32.xlu0 %v1734
        %v1737 = vpop.xlane.xlu0 %1736
        %1738 = vadd.xlane.f32.xlu0 %v1735
        %v1739 = vpop.xlane.xlu0 %1738
        %v1740 = vcvt.f32.s32 %v1737
        %v1741 = vcvt.f32.s32 %v1739
        %v1742 = vshll.u32 %v1741, 16
        %v1743 = vadd.s32 %v1742, %v1740
        %v1744 = vsel %vm538, %v1730, 0
        %v1745 = vand.u32 %v1744, 65535
        %v1746 = vshrl.u32 %v1744, 16
        %v1747 = vcvt.s32.f32 %v1745
        %v1748 = vcvt.s32.f32 %v1746
        %1749 = vadd.xlane.f32.xlu0 %v1747
        %v1750 = vpop.xlane.xlu0 %1749
        %1751 = vadd.xlane.f32.xlu0 %v1748
        %v1752 = vpop.xlane.xlu0 %1751
        %v1753 = vcvt.f32.s32 %v1750
        %v1754 = vcvt.f32.s32 %v1752
        %v1755 = vshll.u32 %v1754, 16
        %v1756 = vadd.s32 %v1755, %v1753
        %vm1757 = vcmp.eq.s32.totalorder %v1172, %v1743
        %vm1758 = vcmp.eq.s32.totalorder %v1172, %v1756
        %v1759 = vsel %vm1757, 1, 0
        %v1760 = vsel %vm1758, 1, 0
        %v1761 = vadd.s32 %v1727, %v1759
        %v1762 = vadd.s32 %v1728, %v1760
        %v1763 = vsel %vm1438, %v1505, 0
        %v1764 = vsel %vm1438, %v1506, 0
        %v1765 = vsel %vm538, %v1763, 0
        %v1766 = vand.u32 %v1765, 65535
        %v1767 = vshrl.u32 %v1765, 16
        %v1768 = vcvt.s32.f32 %v1766
        %v1769 = vcvt.s32.f32 %v1767
        %1770 = vadd.xlane.f32.xlu0 %v1768
        %v1771 = vpop.xlane.xlu0 %1770
        %1772 = vadd.xlane.f32.xlu0 %v1769
        %v1773 = vpop.xlane.xlu0 %1772
        %v1774 = vcvt.f32.s32 %v1771
        %v1775 = vcvt.f32.s32 %v1773
        %v1776 = vshll.u32 %v1775, 16
        %v1777 = vadd.s32 %v1776, %v1774
        %v1778 = vsel %vm538, %v1764, 0
        %v1779 = vand.u32 %v1778, 65535
        %v1780 = vshrl.u32 %v1778, 16
        %v1781 = vcvt.s32.f32 %v1779
        %v1782 = vcvt.s32.f32 %v1780
        %1783 = vadd.xlane.f32.xlu0 %v1781
        %v1784 = vpop.xlane.xlu0 %1783
        %1785 = vadd.xlane.f32.xlu0 %v1782
        %v1786 = vpop.xlane.xlu0 %1785
        %v1787 = vcvt.f32.s32 %v1784
        %v1788 = vcvt.f32.s32 %v1786
        %v1789 = vshll.u32 %v1788, 16
        %v1790 = vadd.s32 %v1789, %v1787
        %vm1791 = vcmp.eq.s32.totalorder %v1172, %v1777
        %vm1792 = vcmp.eq.s32.totalorder %v1172, %v1790
        %v1793 = vsel %vm1791, 1, 0
        %v1794 = vsel %vm1792, 1, 0
        %v1795 = vadd.s32 %v1761, %v1793
        %v1796 = vadd.s32 %v1762, %v1794
        %v1797 = vcvt.s32.f32 %v1795
        %v1798 = vcvt.s32.f32 %v1796
        %v1799 = vmul.f32 %v1797, %v1165
        %v1800 = vmul.f32 %v1798, %v1168
        %v1801 = vadd.f32 %v1799, %v1800
        %1802 = vadd.xlane.f32.xlu0 %v1801
        %v1803 = vpop.xlane.xlu0 %1802
        %v1804 = vrot.slane %v1803, 4
        %v1805 = vadd.f32 %v1803, %v1804
        %v1806 = vrot.slane %v1805, 2
        %v1807 = vadd.f32 %v1805, %v1806
        %v1808 = vrot.slane %v1807, 1
        %v1809 = vadd.f32 %v1807, %v1808
        %s1810 = vtos %v1809
        %v1811 = vstv %s1810
        %v1812 = vmul.f32 %v541, %v1525
        %v1813 = vmul.f32 %v544, %v1526
        %v1814 = vsel %vm1490, %v1812, 0.0
        %v1815 = vsel %vm1490, %v1813, 0.0
        %v1816 = vadd.f32 %v1814, %v1815
        %1817 = vadd.xlane.f32.xlu0 %v1816
        %v1818 = vpop.xlane.xlu0 %1817
        %v1819 = vrot.slane %v1818, 4
        %v1820 = vadd.f32 %v1818, %v1819
        %v1821 = vrot.slane %v1820, 2
        %v1822 = vadd.f32 %v1820, %v1821
        %v1823 = vrot.slane %v1822, 1
        %v1824 = vadd.f32 %v1822, %v1823
        %s1825 = vtos %v1824
        %v1826 = vstv %s1825
        %v1827 = vsub.f32 %v1826, %v1811
        %v1828 = vadd.f32 %v1504, %v1827
        %v1829 = vsel %vm1490, %v541, 0.0
        %v1830 = vsel %vm1490, %v544, 0.0
        %v1831 = vadd.f32 %v1829, %v1830
        %1832 = vadd.xlane.f32.xlu0 %v1831
        %v1833 = vpop.xlane.xlu0 %1832
        %v1834 = vrot.slane %v1833, 4
        %v1835 = vadd.f32 %v1833, %v1834
        %v1836 = vrot.slane %v1835, 2
        %v1837 = vadd.f32 %v1835, %v1836
        %v1838 = vrot.slane %v1837, 1
        %v1839 = vadd.f32 %v1837, %v1838
        %s1840 = vtos %v1839
        %1841 = vst [vmem:[%s509] sm:$0x1] %v1828
        %v1842 = vstv %s1840
        %1843 = vst [vmem:[%s515] sm:$0x1] %v1842
        %s1844 = sand.u32 %s314, 1
        %s1845 = scalar_lea.sflag [#allocation4], %s1844
        %s1846 = sand.u32 %s314, 1
        %s1847 = scalar_lea.vmem [#allocation5], %s1846
        %s1848 = sand.u32 %s340, 1
        %s1849 = scalar_lea.sflag [#allocation7], %s1848
        %s1850 = sand.u32 %s340, 1
        %s1851 = scalar_lea.vmem [#allocation6], %s1850
        // Predicated region
        $region73: #{tpu_custom_call.1} parent=67 // pred_check
          %p1852 = pneg %p324
        $region74: #{tpu_custom_call.1} parent=67 // pred_check_branch
          %1854 = sbr.rel (%p1852) target = $region76
        $region75: #{tpu_custom_call.1} parent=67 // pred_region
          %s1856 = ssub.s32 16, 16
          %1857 = vsyncadd %s1845, %s1856
          %s1858 = smul.addr %s34, 16
          %s1859 = scalar_lea.hbm %s12, %s1858
          %s1861 = sshll.u32 %s1847, 4
          %s1862 = int_to_ptr.vmem [resolvable:$true] %s1861
          %1864 = dma.vmem_to_hbm [thread:$0]  %s1862, 16, %s1859, %s1845
        $region76: #{tpu_custom_call.1} parent=67 // pred_fallthru
          _
        // Predicated region
        $region77: #{tpu_custom_call.1} parent=67 // pred_check
          %p1865 = pneg %p350
        $region78: #{tpu_custom_call.1} parent=67 // pred_check_branch
          %1867 = sbr.rel (%p1865) target = $region80
        $region79: #{tpu_custom_call.1} parent=67 // pred_region
          %s1869 = ssub.s32 16, 16
          %1870 = vsyncadd %s1849, %s1869
          %s1871 = smul.addr %s34, 16
          %s1872 = scalar_lea.hbm %s13, %s1871
          %s1874 = sshll.u32 %s1851, 4
          %s1875 = int_to_ptr.vmem [resolvable:$true] %s1874
          %1877 = dma.vmem_to_hbm [thread:$0]  %s1875, 16, %s1872, %s1849
        $region80: #{tpu_custom_call.1} parent=67 // pred_fallthru
          _
      $region68: #{tpu_custom_call.1} parent=5 // pred_fallthru
        _
      %p1878 = scmp.le.s32.totalorder 2, %s29
      // Predicated region
      $region81: #{tpu_custom_call.1} parent=5 // pred_check
        %p1879 = pneg %p1878
      $region82: #{tpu_custom_call.1} parent=5 // pred_check_branch
        %1881 = sbr.rel (%p1879) target = $region84
      $region83: #{tpu_custom_call.1} parent=5 // pred_region
        %s1882 = ssub.s32 %s29, 2
        // Predicated region
        $region85: #{tpu_custom_call.1} parent=83 // pred_check
          %p1883 = pneg %p330
        $region86: #{tpu_custom_call.1} parent=83 // pred_check_branch
          %1885 = sbr.rel (%p1883) target = $region88
        $region87: #{tpu_custom_call.1} parent=83 // pred_region
          %s1886 = sand.u32 %s315, 1
          %s1887 = scalar_lea.sflag [#allocation4], %s1886
          %s1888 = sand.u32 %s315, 1
          %s1889 = scalar_lea.vmem [#allocation5], %s1888
          %1890 = dma.done %s1887, 16
        $region88: #{tpu_custom_call.1} parent=83 // pred_fallthru
          _
        // Predicated region
        $region89: #{tpu_custom_call.1} parent=83 // pred_check
          %p1891 = pneg %p356
        $region90: #{tpu_custom_call.1} parent=83 // pred_check_branch
          %1893 = sbr.rel (%p1891) target = $region92
        $region91: #{tpu_custom_call.1} parent=83 // pred_region
          %s1894 = sand.u32 %s341, 1
          %s1895 = scalar_lea.sflag [#allocation7], %s1894
          %s1896 = sand.u32 %s341, 1
          %s1897 = scalar_lea.vmem [#allocation6], %s1896
          %1898 = dma.done %s1895, 16
        $region92: #{tpu_custom_call.1} parent=83 // pred_fallthru
          _
      $region84: #{tpu_custom_call.1} parent=5 // pred_fallthru
        _
    $region6: #{tpu_custom_call.1} parent=1 // loop_footer
      %s33 = sadd.s32 1, %s29
    $region7: #{tpu_custom_call.1} parent=1 // loop_footer_branch
      %28 = sbr.rel target = $region3
    $region8: #{tpu_custom_call.1} parent=1 // loop_exit
      _
    %1899 = vsyncpa [#allocation3], 1
    %s1900 = scalar_lea.sflag [#allocation3], 1
    %1901 = vsyncpa %s1900, 1
    %1902 = vsyncpa [#allocation4], 1
    %s1903 = scalar_lea.sflag [#allocation4], 1
    %1904 = vsyncpa %s1903, 1
    %1905 = vsyncpa [#allocation7], 1
    %s1906 = scalar_lea.sflag [#allocation7], 1
    %1907 = vsyncpa %s1906, 1

</llo_original>
